<compile_context>
chip_gen: v7x
topology: tpu7x:2x2x1
jax: 0.10.0
libtpu: 0.0.40
codegen_flags: <defaults>
</compile_context>

<pallas_src>
import jax
import jax.numpy as jnp
from jax import lax
from jax.experimental import pallas as pl
from jax.experimental.pallas import tpu as pltpu

B, T, D = 2, 16, 32          # batch, seq length, model dim
K = 17                       # conv kernel size
GROUPS = 4
PAD = K // 2                 # 'same' padding (= 8, sublane aligned)
EPS_LN = 1e-5
EPS_BN = 1e-5
BT = B * T

# dtype fed to the MXU (accumulation stays f32).
MXU_DTYPE = jnp.bfloat16

# row indices of the packed per-channel vector slab (one (VEC_ROWS, D) array)
LN1_G, LN1_B = 0, 1
EXP_B_OUT, EXP_B_GATE = 2, 3
CONV_B = 4
BN_G, BN_B = 5, 6
PROJ_B = 7
CS_S, CS_B = 8, 9
LN2_G, LN2_B = 10, 11
F2_B = 12
MS_S, MS_B = 13, 14
VEC_ROWS = 16                # padded to a multiple of 8 sublanes


def _sigmoid(z):
    # EUP exp + EUP approximate reciprocal (keeps the divide off the VALU).
    return pl.reciprocal(1.0 + jnp.exp(-z), approx=True)


def _silu(z):
    return z * _sigmoid(z)


def _layernorm(z, g, b):
    m = jnp.mean(z, axis=-1, keepdims=True)
    v = jnp.mean(jnp.square(z - m), axis=-1, keepdims=True)
    return (z - m) * lax.rsqrt(v + EPS_LN) * g + b


def _dot(a, w):
    # bf16 operands, f32 accumulation on the MXU.
    return jnp.dot(a.astype(MXU_DTYPE), w.astype(MXU_DTYPE),
                   preferred_element_type=jnp.float32)


def conv1d_block_kernel(x_ref, vec_ref, f1b_ref, w_dd_ref, conv_w_ref,
                        f1w_ref, f2w_ref, out_ref):
    x_in = x_ref[...]                                   # (BT, D) f32
    vec = vec_ref[...]                                  # (VEC_ROWS, D) f32
    f1b = f1b_ref[...]                                  # (2, 2D) f32
    row = lambda i: vec[i:i + 1, :]                     # (1, D), broadcasts

    # ---------------- conv branch (prenorm) ----------------
    h = _layernorm(x_in, row(LN1_G), row(LN1_B))                    # norm1
    h = ((_dot(h, w_dd_ref[0]) + row(EXP_B_OUT)) *                  # GLU out half
         _silu(_dot(h, w_dd_ref[1]) + row(EXP_B_GATE)))             # * swish(gate)

    # grouped 'same' Conv1d as a single im2col matmul:
    #   cols (BT, K*D) @ W (K*D, D), W = block-diagonal expansion of the
    #   torch (D, D/GROUPS, K) weight.
    h3 = h.reshape(B, T, D)                             # sublane-aligned split
    zpad = jnp.zeros((B, PAD, D), jnp.float32)
    hpad = jnp.concatenate([zpad, h3, zpad], axis=1)    # (B, T+2*PAD, D)
    cols = jnp.concatenate([hpad[:, k:k + T, :] for k in range(K)],
                           axis=-1)                     # (B, T, K*D)
    acc = _dot(cols.reshape(BT, K * D), conv_w_ref[...]) + row(CONV_B)

    # MaskedBatchNorm1d (mask=None): training-mode per-channel stats over B*T.
    mu = jnp.mean(acc, axis=0, keepdims=True)
    var = jnp.mean(jnp.square(acc - mu), axis=0, keepdims=True)
    h = (acc - mu) * lax.rsqrt(var + EPS_BN) * row(BN_G) + row(BN_B)

    h = _silu(h)                                                    # conv_act
    h = _dot(h, w_dd_ref[2]) + row(PROJ_B)                          # conv_proj
    h = h * row(CS_S) + row(CS_B)                                   # conv_scale
    conv_out = h + x_in                                             # residual

    # ---------------- MLP branch (prenorm) ----------------
    y = _layernorm(conv_out, row(LN2_G), row(LN2_B))                # norm2
    y = ((_dot(y, f1w_ref[0]) + f1b[0:1, :]) *                      # ffn1 GLU out
         _silu(_dot(y, f1w_ref[1]) + f1b[1:2, :]))                  # * swish(gate)
    y = _dot(y, f2w_ref[...]) + row(F2_B)                           # ffn2
    y = y * row(MS_S) + row(MS_B)                                   # mlp_scale

    out_ref[...] = conv_out + y                                     # residual


def conv1d_block(x, packed):
    args = (x.reshape(BT, D),) + tuple(packed)
    out = pl.pallas_call(
        conv1d_block_kernel,
        out_shape=jax.ShapeDtypeStruct((BT, D), jnp.float32),
        in_specs=[pl.BlockSpec(memory_space=pltpu.MemorySpace.VMEM)] * len(args),
        out_specs=pl.BlockSpec(memory_space=pltpu.MemorySpace.VMEM),
    )(*args)
    return out.reshape(B, T, D)


def init_params(key):
    ks = jax.random.split(key, 10)
    rnd = lambda k, shape: (0.05 * jax.random.normal(k, shape)).astype(jnp.float32)
    ones = lambda n: jnp.ones((n,), jnp.float32)
    zeros = lambda n: jnp.zeros((n,), jnp.float32)
    dg = D // GROUPS
    return dict(
        ln1_g=ones(D), ln1_b=zeros(D),
        exp_w=rnd(ks[0], (D, 2 * D)), exp_b=rnd(ks[1], (2 * D,)),
        conv_w=rnd(ks[2], (D, dg, K)),              # torch layout (out, in/group, K)
        conv_b=rnd(ks[3], (D,)),
        bn_g=ones(D), bn_b=zeros(D),
        proj_w=rnd(ks[4], (D, D)), proj_b=rnd(ks[5], (D,)),
        cs_s=ones(D), cs_b=zeros(D),
        ln2_g=ones(D), ln2_b=zeros(D),
        f1_w=rnd(ks[6], (D, 4 * D)), f1_b=rnd(ks[7], (4 * D,)),
        f2_w=rnd(ks[8], (2 * D, D)), f2_b=rnd(ks[9], (D,)),
        ms_s=ones(D), ms_b=zeros(D),
    )


def pack_params(p):
    dg = D // GROUPS

    # one slab for every per-channel scale/bias vector (1 DMA instead of ~15)
    vec = jnp.zeros((VEC_ROWS, D), jnp.float32)
    for r, v in ((LN1_G, p["ln1_g"]), (LN1_B, p["ln1_b"]),
                 (EXP_B_OUT, p["exp_b"][:D]), (EXP_B_GATE, p["exp_b"][D:]),
                 (CONV_B, p["conv_b"]),
                 (BN_G, p["bn_g"]), (BN_B, p["bn_b"]),
                 (PROJ_B, p["proj_b"]),
                 (CS_S, p["cs_s"]), (CS_B, p["cs_b"]),
                 (LN2_G, p["ln2_g"]), (LN2_B, p["ln2_b"]),
                 (F2_B, p["f2_b"]),
                 (MS_S, p["ms_s"]), (MS_B, p["ms_b"])):
        vec = vec.at[r].set(v)
    f1b = jnp.stack([p["f1_b"][:2 * D], p["f1_b"][2 * D:]])         # (2, 2D)

    # (D, D) matmul weights packed together; GLU weights pre-split into halves.
    w_dd = jnp.stack([p["exp_w"][:, :D], p["exp_w"][:, D:], p["proj_w"]])
    f1w = jnp.stack([p["f1_w"][:, :2 * D], p["f1_w"][:, 2 * D:]])   # (2, D, 2D)

    # grouped conv weight -> block-diagonal im2col weight (K*D, D)
    wk = jnp.zeros((K, D, D), jnp.float32)
    for c in range(D):
        g = c // dg
        wk = wk.at[:, g * dg:(g + 1) * dg, c].set(p["conv_w"][c].T)
    conv_w = wk.reshape(K * D, D)

    cast = lambda w: w.astype(MXU_DTYPE)   # bf16-resident MXU weights
    return (vec, f1b, cast(w_dd), cast(conv_w), cast(f1w), cast(p["f2_w"]))


def reference(x, p):
    def ln(z, g, b):
        m = z.mean(-1, keepdims=True)
        v = ((z - m) ** 2).mean(-1, keepdims=True)
        return (z - m) / jnp.sqrt(v + EPS_LN) * g + b

    silu = lambda z: z * jax.nn.sigmoid(z)

    h = ln(x, p["ln1_g"], p["ln1_b"])
    h = h @ p["exp_w"] + p["exp_b"]
    h = h[..., :D] * silu(h[..., D:])
    # grouped 'same' Conv1d with torch NCW semantics (cross-correlation)
    h_ncw = jnp.transpose(h, (0, 2, 1))
    conv = lax.conv_general_dilated(
        h_ncw, p["conv_w"], window_strides=(1,), padding=[(PAD, PAD)],
        feature_group_count=GROUPS, dimension_numbers=("NCH", "OIH", "NCH"))
    conv = conv + p["conv_b"][None, :, None]
    mu = conv.mean((0, 2), keepdims=True)
    var = ((conv - mu) ** 2).mean((0, 2), keepdims=True)
    h = ((conv - mu) / jnp.sqrt(var + EPS_BN) * p["bn_g"][None, :, None]
         + p["bn_b"][None, :, None])
    h = silu(h)
    h = jnp.transpose(h, (0, 2, 1))
    h = h @ p["proj_w"] + p["proj_b"]
    h = h * p["cs_s"] + p["cs_b"]
    conv_out = h + x
    y = ln(conv_out, p["ln2_g"], p["ln2_b"])
    y = y @ p["f1_w"] + p["f1_b"]
    y = y[..., :2 * D] * silu(y[..., 2 * D:])
    y = y @ p["f2_w"] + p["f2_b"]
    y = y * p["ms_s"] + p["ms_b"]
    return conv_out + y


if __name__ == "__main__":
    key = jax.random.PRNGKey(0)
    kx, kp = jax.random.split(key)
    x = jax.random.normal(kx, (B, T, D), dtype=jnp.float32)
    params = init_params(kp)
    packed = pack_params(params)

    out = jax.block_until_ready(conv1d_block(x, packed))
    ref = reference(x, params)

    assert out.shape == (B, T, D)
    # Tolerance accounts for bf16 MXU operands (f32 accumulation) vs the
    # pure-f32 JAX reference; observed error is ~1e-3.
    assert jnp.allclose(out, ref, atol=1e-2, rtol=1e-2), (
        "mismatch vs JAX reference; max abs diff = "
        f"{float(jnp.max(jnp.abs(out - ref)))}")
    print("KERNEL_OK")
</pallas_src>

<mosaic_0001>
module attributes {stable_mosaic.version = 11 : i64} {
  func.func @conv1d_block_kernel(%arg0: memref<32x32xf32, #tpu.memory_space<vmem>>, %arg1: memref<16x32xf32, #tpu.memory_space<vmem>>, %arg2: memref<2x64xf32, #tpu.memory_space<vmem>>, %arg3: memref<3x32x32xbf16, #tpu.memory_space<vmem>>, %arg4: memref<544x32xbf16, #tpu.memory_space<vmem>>, %arg5: memref<2x32x64xbf16, #tpu.memory_space<vmem>>, %arg6: memref<64x32xbf16, #tpu.memory_space<vmem>>, %arg7: memref<32x32xf32, #tpu.memory_space<vmem>>) attributes {dimension_semantics = [], scalar_prefetch = 0 : i64, scratch_operands = 0 : i64, tpu.core_type = #tpu.core_type<tc>} {
    %c0 = arith.constant 0 : index
    %c0_0 = arith.constant 0 : index
    %0 = vector.load %arg0[%c0, %c0_0] : memref<32x32xf32, #tpu.memory_space<vmem>>, vector<32x32xf32>
    %c0_1 = arith.constant 0 : index
    %c0_2 = arith.constant 0 : index
    %1 = vector.load %arg1[%c0_1, %c0_2] : memref<16x32xf32, #tpu.memory_space<vmem>>, vector<16x32xf32>
    %c0_3 = arith.constant 0 : index
    %c0_4 = arith.constant 0 : index
    %2 = vector.load %arg2[%c0_3, %c0_4] : memref<2x64xf32, #tpu.memory_space<vmem>>, vector<2x64xf32>
    %3 = vector.extract_strided_slice %1 {offsets = [0, 0], sizes = [1, 32], strides = [1, 1]} : vector<16x32xf32> to vector<1x32xf32>
    %4 = vector.extract_strided_slice %1 {offsets = [1, 0], sizes = [1, 32], strides = [1, 1]} : vector<16x32xf32> to vector<1x32xf32>
    %cst = arith.constant dense<0.000000e+00> : vector<32xf32>
    %5 = vector.multi_reduction <add>, %0, %cst [1] : vector<32x32xf32> to vector<32xf32>
    %6 = vector.shape_cast %5 : vector<32xf32> to vector<32x1xf32>
    %cst_5 = arith.constant 3.200000e+01 : f32
    %7 = vector.broadcast %cst_5 : f32 to vector<32x1xf32>
    %8 = arith.divf %6, %7 : vector<32x1xf32>
    %9 = vector.broadcast %8 : vector<32x1xf32> to vector<32x32xf32>
    %10 = arith.subf %0, %9 : vector<32x32xf32>
    %11 = arith.mulf %10, %10 : vector<32x32xf32>
    %cst_6 = arith.constant dense<0.000000e+00> : vector<32xf32>
    %12 = vector.multi_reduction <add>, %11, %cst_6 [1] : vector<32x32xf32> to vector<32xf32>
    %13 = vector.shape_cast %12 : vector<32xf32> to vector<32x1xf32>
    %cst_7 = arith.constant 3.200000e+01 : f32
    %14 = vector.broadcast %cst_7 : f32 to vector<32x1xf32>
    %15 = arith.divf %13, %14 : vector<32x1xf32>
    %16 = vector.broadcast %8 : vector<32x1xf32> to vector<32x32xf32>
    %17 = arith.subf %0, %16 : vector<32x32xf32>
    %cst_8 = arith.constant 9.99999974E-6 : f32
    %18 = vector.broadcast %cst_8 : f32 to vector<32x1xf32>
    %19 = arith.addf %15, %18 : vector<32x1xf32>
    %20 = math.rsqrt %19 : vector<32x1xf32>
    %21 = vector.broadcast %20 : vector<32x1xf32> to vector<32x32xf32>
    %22 = arith.mulf %17, %21 : vector<32x32xf32>
    %23 = vector.broadcast %3 : vector<1x32xf32> to vector<32x32xf32>
    %24 = arith.mulf %22, %23 : vector<32x32xf32>
    %25 = vector.broadcast %4 : vector<1x32xf32> to vector<32x32xf32>
    %26 = arith.addf %24, %25 : vector<32x32xf32>
    %c0_9 = arith.constant 0 : index
    %c0_10 = arith.constant 0 : index
    %c0_11 = arith.constant 0 : index
    %27 = vector.load %arg3[%c0_9, %c0_10, %c0_11] : memref<3x32x32xbf16, #tpu.memory_space<vmem>>, vector<1x32x32xbf16>
    %28 = vector.shape_cast %27 : vector<1x32x32xbf16> to vector<32x32xbf16>
    %29 = arith.truncf %26 : vector<32x32xf32> to vector<32x32xbf16>
    %cst_12 = arith.constant dense<0.000000e+00> : vector<32x32xf32>
    %30 = tpu.matmul %29, %28, %cst_12 {dimension_numbers = #tpu.dot_dimension_numbers<[1], [0], [0], [1], [0, 0, 1, 1], [], []>} : vector<32x32xbf16>, vector<32x32xbf16>, vector<32x32xf32> -> vector<32x32xf32>
    %31 = vector.extract_strided_slice %1 {offsets = [2, 0], sizes = [1, 32], strides = [1, 1]} : vector<16x32xf32> to vector<1x32xf32>
    %32 = vector.broadcast %31 : vector<1x32xf32> to vector<32x32xf32>
    %33 = arith.addf %30, %32 : vector<32x32xf32>
    %c1 = arith.constant 1 : index
    %c0_13 = arith.constant 0 : index
    %c0_14 = arith.constant 0 : index
    %34 = vector.load %arg3[%c1, %c0_13, %c0_14] : memref<3x32x32xbf16, #tpu.memory_space<vmem>>, vector<1x32x32xbf16>
    %35 = vector.shape_cast %34 : vector<1x32x32xbf16> to vector<32x32xbf16>
    %36 = arith.truncf %26 : vector<32x32xf32> to vector<32x32xbf16>
    %cst_15 = arith.constant dense<0.000000e+00> : vector<32x32xf32>
    %37 = tpu.matmul %36, %35, %cst_15 {dimension_numbers = #tpu.dot_dimension_numbers<[1], [0], [0], [1], [0, 0, 1, 1], [], []>} : vector<32x32xbf16>, vector<32x32xbf16>, vector<32x32xf32> -> vector<32x32xf32>
    %38 = vector.extract_strided_slice %1 {offsets = [3, 0], sizes = [1, 32], strides = [1, 1]} : vector<16x32xf32> to vector<1x32xf32>
    %39 = vector.broadcast %38 : vector<1x32xf32> to vector<32x32xf32>
    %40 = arith.addf %37, %39 : vector<32x32xf32>
    %cst_16 = arith.constant 0.000000e+00 : f32
    %41 = vector.broadcast %cst_16 : f32 to vector<32x32xf32>
    %42 = arith.subf %41, %40 : vector<32x32xf32>
    %43 = math.exp %42 : vector<32x32xf32>
    %cst_17 = arith.constant 1.000000e+00 : f32
    %44 = vector.broadcast %cst_17 : f32 to vector<32x32xf32>
    %45 = arith.addf %44, %43 : vector<32x32xf32>
    %46 = tpu.reciprocal %45 {approx = true} : vector<32x32xf32> -> vector<32x32xf32>
    %47 = arith.mulf %40, %46 : vector<32x32xf32>
    %48 = arith.mulf %33, %47 : vector<32x32xf32>
    %49 = vector.shape_cast %48 : vector<32x32xf32> to vector<2x16x32xf32>
    %cst_18 = arith.constant 0.000000e+00 : f32
    %50 = vector.broadcast %cst_18 : f32 to vector<2x8x32xf32>
    %51 = tpu.concatenate %50, %49, %50 in 1 : vector<2x8x32xf32>, vector<2x16x32xf32>, vector<2x8x32xf32> -> vector<2x32x32xf32>
    %52 = vector.extract_strided_slice %51 {offsets = [0, 0, 0], sizes = [2, 16, 32], strides = [1, 1, 1]} : vector<2x32x32xf32> to vector<2x16x32xf32>
    %53 = vector.extract_strided_slice %51 {offsets = [0, 1, 0], sizes = [2, 16, 32], strides = [1, 1, 1]} : vector<2x32x32xf32> to vector<2x16x32xf32>
    %54 = vector.extract_strided_slice %51 {offsets = [0, 2, 0], sizes = [2, 16, 32], strides = [1, 1, 1]} : vector<2x32x32xf32> to vector<2x16x32xf32>
    %55 = vector.extract_strided_slice %51 {offsets = [0, 3, 0], sizes = [2, 16, 32], strides = [1, 1, 1]} : vector<2x32x32xf32> to vector<2x16x32xf32>
    %56 = vector.extract_strided_slice %51 {offsets = [0, 4, 0], sizes = [2, 16, 32], strides = [1, 1, 1]} : vector<2x32x32xf32> to vector<2x16x32xf32>
    %57 = vector.extract_strided_slice %51 {offsets = [0, 5, 0], sizes = [2, 16, 32], strides = [1, 1, 1]} : vector<2x32x32xf32> to vector<2x16x32xf32>
    %58 = vector.extract_strided_slice %51 {offsets = [0, 6, 0], sizes = [2, 16, 32], strides = [1, 1, 1]} : vector<2x32x32xf32> to vector<2x16x32xf32>
    %59 = vector.extract_strided_slice %51 {offsets = [0, 7, 0], sizes = [2, 16, 32], strides = [1, 1, 1]} : vector<2x32x32xf32> to vector<2x16x32xf32>
    %60 = vector.extract_strided_slice %51 {offsets = [0, 8, 0], sizes = [2, 16, 32], strides = [1, 1, 1]} : vector<2x32x32xf32> to vector<2x16x32xf32>
    %61 = vector.extract_strided_slice %51 {offsets = [0, 9, 0], sizes = [2, 16, 32], strides = [1, 1, 1]} : vector<2x32x32xf32> to vector<2x16x32xf32>
    %62 = vector.extract_strided_slice %51 {offsets = [0, 10, 0], sizes = [2, 16, 32], strides = [1, 1, 1]} : vector<2x32x32xf32> to vector<2x16x32xf32>
    %63 = vector.extract_strided_slice %51 {offsets = [0, 11, 0], sizes = [2, 16, 32], strides = [1, 1, 1]} : vector<2x32x32xf32> to vector<2x16x32xf32>
    %64 = vector.extract_strided_slice %51 {offsets = [0, 12, 0], sizes = [2, 16, 32], strides = [1, 1, 1]} : vector<2x32x32xf32> to vector<2x16x32xf32>
    %65 = vector.extract_strided_slice %51 {offsets = [0, 13, 0], sizes = [2, 16, 32], strides = [1, 1, 1]} : vector<2x32x32xf32> to vector<2x16x32xf32>
    %66 = vector.extract_strided_slice %51 {offsets = [0, 14, 0], sizes = [2, 16, 32], strides = [1, 1, 1]} : vector<2x32x32xf32> to vector<2x16x32xf32>
    %67 = vector.extract_strided_slice %51 {offsets = [0, 15, 0], sizes = [2, 16, 32], strides = [1, 1, 1]} : vector<2x32x32xf32> to vector<2x16x32xf32>
    %68 = vector.extract_strided_slice %51 {offsets = [0, 16, 0], sizes = [2, 16, 32], strides = [1, 1, 1]} : vector<2x32x32xf32> to vector<2x16x32xf32>
    %69 = tpu.concatenate %52, %53, %54, %55, %56, %57, %58, %59, %60, %61, %62, %63, %64, %65, %66, %67 in 2 : vector<2x16x32xf32>, vector<2x16x32xf32>, vector<2x16x32xf32>, vector<2x16x32xf32>, vector<2x16x32xf32>, vector<2x16x32xf32>, vector<2x16x32xf32>, vector<2x16x32xf32>, vector<2x16x32xf32>, vector<2x16x32xf32>, vector<2x16x32xf32>, vector<2x16x32xf32>, vector<2x16x32xf32>, vector<2x16x32xf32>, vector<2x16x32xf32>, vector<2x16x32xf32> -> vector<2x16x512xf32>
    %70 = tpu.concatenate %69, %68 in 2 : vector<2x16x512xf32>, vector<2x16x32xf32> -> vector<2x16x544xf32>
    %71 = vector.shape_cast %70 : vector<2x16x544xf32> to vector<32x544xf32>
    %c0_19 = arith.constant 0 : index
    %c0_20 = arith.constant 0 : index
    %72 = vector.load %arg4[%c0_19, %c0_20] : memref<544x32xbf16, #tpu.memory_space<vmem>>, vector<544x32xbf16>
    %73 = arith.truncf %71 : vector<32x544xf32> to vector<32x544xbf16>
    %cst_21 = arith.constant dense<0.000000e+00> : vector<32x32xf32>
    %74 = tpu.matmul %73, %72, %cst_21 {dimension_numbers = #tpu.dot_dimension_numbers<[1], [0], [0], [1], [0, 0, 1, 1], [], []>} : vector<32x544xbf16>, vector<544x32xbf16>, vector<32x32xf32> -> vector<32x32xf32>
    %75 = vector.extract_strided_slice %1 {offsets = [4, 0], sizes = [1, 32], strides = [1, 1]} : vector<16x32xf32> to vector<1x32xf32>
    %76 = vector.broadcast %75 : vector<1x32xf32> to vector<32x32xf32>
    %77 = arith.addf %74, %76 : vector<32x32xf32>
    %cst_22 = arith.constant dense<0.000000e+00> : vector<32xf32>
    %78 = vector.multi_reduction <add>, %77, %cst_22 [0] : vector<32x32xf32> to vector<32xf32>
    %79 = vector.shape_cast %78 : vector<32xf32> to vector<1x32xf32>
    %cst_23 = arith.constant 3.200000e+01 : f32
    %80 = vector.broadcast %cst_23 : f32 to vector<1x32xf32>
    %81 = arith.divf %79, %80 : vector<1x32xf32>
    %82 = vector.broadcast %81 : vector<1x32xf32> to vector<32x32xf32>
    %83 = arith.subf %77, %82 : vector<32x32xf32>
    %84 = arith.mulf %83, %83 : vector<32x32xf32>
    %cst_24 = arith.constant dense<0.000000e+00> : vector<32xf32>
    %85 = vector.multi_reduction <add>, %84, %cst_24 [0] : vector<32x32xf32> to vector<32xf32>
    %86 = vector.shape_cast %85 : vector<32xf32> to vector<1x32xf32>
    %cst_25 = arith.constant 3.200000e+01 : f32
    %87 = vector.broadcast %cst_25 : f32 to vector<1x32xf32>
    %88 = arith.divf %86, %87 : vector<1x32xf32>
    %89 = vector.broadcast %81 : vector<1x32xf32> to vector<32x32xf32>
    %90 = arith.subf %77, %89 : vector<32x32xf32>
    %cst_26 = arith.constant 9.99999974E-6 : f32
    %91 = vector.broadcast %cst_26 : f32 to vector<1x32xf32>
    %92 = arith.addf %88, %91 : vector<1x32xf32>
    %93 = math.rsqrt %92 : vector<1x32xf32>
    %94 = vector.broadcast %93 : vector<1x32xf32> to vector<32x32xf32>
    %95 = arith.mulf %90, %94 : vector<32x32xf32>
    %96 = vector.extract_strided_slice %1 {offsets = [5, 0], sizes = [1, 32], strides = [1, 1]} : vector<16x32xf32> to vector<1x32xf32>
    %97 = vector.broadcast %96 : vector<1x32xf32> to vector<32x32xf32>
    %98 = arith.mulf %95, %97 : vector<32x32xf32>
    %99 = vector.extract_strided_slice %1 {offsets = [6, 0], sizes = [1, 32], strides = [1, 1]} : vector<16x32xf32> to vector<1x32xf32>
    %100 = vector.broadcast %99 : vector<1x32xf32> to vector<32x32xf32>
    %101 = arith.addf %98, %100 : vector<32x32xf32>
    %cst_27 = arith.constant 0.000000e+00 : f32
    %102 = vector.broadcast %cst_27 : f32 to vector<32x32xf32>
    %103 = arith.subf %102, %101 : vector<32x32xf32>
    %104 = math.exp %103 : vector<32x32xf32>
    %cst_28 = arith.constant 1.000000e+00 : f32
    %105 = vector.broadcast %cst_28 : f32 to vector<32x32xf32>
    %106 = arith.addf %105, %104 : vector<32x32xf32>
    %107 = tpu.reciprocal %106 {approx = true} : vector<32x32xf32> -> vector<32x32xf32>
    %108 = arith.mulf %101, %107 : vector<32x32xf32>
    %c2 = arith.constant 2 : index
    %c0_29 = arith.constant 0 : index
    %c0_30 = arith.constant 0 : index
    %109 = vector.load %arg3[%c2, %c0_29, %c0_30] : memref<3x32x32xbf16, #tpu.memory_space<vmem>>, vector<1x32x32xbf16>
    %110 = vector.shape_cast %109 : vector<1x32x32xbf16> to vector<32x32xbf16>
    %111 = arith.truncf %108 : vector<32x32xf32> to vector<32x32xbf16>
    %cst_31 = arith.constant dense<0.000000e+00> : vector<32x32xf32>
    %112 = tpu.matmul %111, %110, %cst_31 {dimension_numbers = #tpu.dot_dimension_numbers<[1], [0], [0], [1], [0, 0, 1, 1], [], []>} : vector<32x32xbf16>, vector<32x32xbf16>, vector<32x32xf32> -> vector<32x32xf32>
    %113 = vector.extract_strided_slice %1 {offsets = [7, 0], sizes = [1, 32], strides = [1, 1]} : vector<16x32xf32> to vector<1x32xf32>
    %114 = vector.broadcast %113 : vector<1x32xf32> to vector<32x32xf32>
    %115 = arith.addf %112, %114 : vector<32x32xf32>
    %116 = vector.extract_strided_slice %1 {offsets = [8, 0], sizes = [1, 32], strides = [1, 1]} : vector<16x32xf32> to vector<1x32xf32>
    %117 = vector.broadcast %116 : vector<1x32xf32> to vector<32x32xf32>
    %118 = arith.mulf %115, %117 : vector<32x32xf32>
    %119 = vector.extract_strided_slice %1 {offsets = [9, 0], sizes = [1, 32], strides = [1, 1]} : vector<16x32xf32> to vector<1x32xf32>
    %120 = vector.broadcast %119 : vector<1x32xf32> to vector<32x32xf32>
    %121 = arith.addf %118, %120 : vector<32x32xf32>
    %122 = arith.addf %121, %0 : vector<32x32xf32>
    %123 = vector.extract_strided_slice %1 {offsets = [10, 0], sizes = [1, 32], strides = [1, 1]} : vector<16x32xf32> to vector<1x32xf32>
    %124 = vector.extract_strided_slice %1 {offsets = [11, 0], sizes = [1, 32], strides = [1, 1]} : vector<16x32xf32> to vector<1x32xf32>
    %cst_32 = arith.constant dense<0.000000e+00> : vector<32xf32>
    %125 = vector.multi_reduction <add>, %122, %cst_32 [1] : vector<32x32xf32> to vector<32xf32>
    %126 = vector.shape_cast %125 : vector<32xf32> to vector<32x1xf32>
    %cst_33 = arith.constant 3.200000e+01 : f32
    %127 = vector.broadcast %cst_33 : f32 to vector<32x1xf32>
    %128 = arith.divf %126, %127 : vector<32x1xf32>
    %129 = vector.broadcast %128 : vector<32x1xf32> to vector<32x32xf32>
    %130 = arith.subf %122, %129 : vector<32x32xf32>
    %131 = arith.mulf %130, %130 : vector<32x32xf32>
    %cst_34 = arith.constant dense<0.000000e+00> : vector<32xf32>
    %132 = vector.multi_reduction <add>, %131, %cst_34 [1] : vector<32x32xf32> to vector<32xf32>
    %133 = vector.shape_cast %132 : vector<32xf32> to vector<32x1xf32>
    %cst_35 = arith.constant 3.200000e+01 : f32
    %134 = vector.broadcast %cst_35 : f32 to vector<32x1xf32>
    %135 = arith.divf %133, %134 : vector<32x1xf32>
    %136 = vector.broadcast %128 : vector<32x1xf32> to vector<32x32xf32>
    %137 = arith.subf %122, %136 : vector<32x32xf32>
    %cst_36 = arith.constant 9.99999974E-6 : f32
    %138 = vector.broadcast %cst_36 : f32 to vector<32x1xf32>
    %139 = arith.addf %135, %138 : vector<32x1xf32>
    %140 = math.rsqrt %139 : vector<32x1xf32>
    %141 = vector.broadcast %140 : vector<32x1xf32> to vector<32x32xf32>
    %142 = arith.mulf %137, %141 : vector<32x32xf32>
    %143 = vector.broadcast %123 : vector<1x32xf32> to vector<32x32xf32>
    %144 = arith.mulf %142, %143 : vector<32x32xf32>
    %145 = vector.broadcast %124 : vector<1x32xf32> to vector<32x32xf32>
    %146 = arith.addf %144, %145 : vector<32x32xf32>
    %c0_37 = arith.constant 0 : index
    %c0_38 = arith.constant 0 : index
    %c0_39 = arith.constant 0 : index
    %147 = vector.load %arg5[%c0_37, %c0_38, %c0_39] : memref<2x32x64xbf16, #tpu.memory_space<vmem>>, vector<1x32x64xbf16>
    %148 = vector.shape_cast %147 : vector<1x32x64xbf16> to vector<32x64xbf16>
    %149 = arith.truncf %146 : vector<32x32xf32> to vector<32x32xbf16>
    %cst_40 = arith.constant dense<0.000000e+00> : vector<32x64xf32>
    %150 = tpu.matmul %149, %148, %cst_40 {dimension_numbers = #tpu.dot_dimension_numbers<[1], [0], [0], [1], [0, 0, 1, 1], [], []>} : vector<32x32xbf16>, vector<32x64xbf16>, vector<32x64xf32> -> vector<32x64xf32>
    %151 = vector.extract_strided_slice %2 {offsets = [0, 0], sizes = [1, 64], strides = [1, 1]} : vector<2x64xf32> to vector<1x64xf32>
    %152 = vector.broadcast %151 : vector<1x64xf32> to vector<32x64xf32>
    %153 = arith.addf %150, %152 : vector<32x64xf32>
    %c1_41 = arith.constant 1 : index
    %c0_42 = arith.constant 0 : index
    %c0_43 = arith.constant 0 : index
    %154 = vector.load %arg5[%c1_41, %c0_42, %c0_43] : memref<2x32x64xbf16, #tpu.memory_space<vmem>>, vector<1x32x64xbf16>
    %155 = vector.shape_cast %154 : vector<1x32x64xbf16> to vector<32x64xbf16>
    %156 = arith.truncf %146 : vector<32x32xf32> to vector<32x32xbf16>
    %cst_44 = arith.constant dense<0.000000e+00> : vector<32x64xf32>
    %157 = tpu.matmul %156, %155, %cst_44 {dimension_numbers = #tpu.dot_dimension_numbers<[1], [0], [0], [1], [0, 0, 1, 1], [], []>} : vector<32x32xbf16>, vector<32x64xbf16>, vector<32x64xf32> -> vector<32x64xf32>
    %158 = vector.extract_strided_slice %2 {offsets = [1, 0], sizes = [1, 64], strides = [1, 1]} : vector<2x64xf32> to vector<1x64xf32>
    %159 = vector.broadcast %158 : vector<1x64xf32> to vector<32x64xf32>
    %160 = arith.addf %157, %159 : vector<32x64xf32>
    %cst_45 = arith.constant 0.000000e+00 : f32
    %161 = vector.broadcast %cst_45 : f32 to vector<32x64xf32>
    %162 = arith.subf %161, %160 : vector<32x64xf32>
    %163 = math.exp %162 : vector<32x64xf32>
    %cst_46 = arith.constant 1.000000e+00 : f32
    %164 = vector.broadcast %cst_46 : f32 to vector<32x64xf32>
    %165 = arith.addf %164, %163 : vector<32x64xf32>
    %166 = tpu.reciprocal %165 {approx = true} : vector<32x64xf32> -> vector<32x64xf32>
    %167 = arith.mulf %160, %166 : vector<32x64xf32>
    %168 = arith.mulf %153, %167 : vector<32x64xf32>
    %c0_47 = arith.constant 0 : index
    %c0_48 = arith.constant 0 : index
    %169 = vector.load %arg6[%c0_47, %c0_48] : memref<64x32xbf16, #tpu.memory_space<vmem>>, vector<64x32xbf16>
    %170 = arith.truncf %168 : vector<32x64xf32> to vector<32x64xbf16>
    %cst_49 = arith.constant dense<0.000000e+00> : vector<32x32xf32>
    %171 = tpu.matmul %170, %169, %cst_49 {dimension_numbers = #tpu.dot_dimension_numbers<[1], [0], [0], [1], [0, 0, 1, 1], [], []>} : vector<32x64xbf16>, vector<64x32xbf16>, vector<32x32xf32> -> vector<32x32xf32>
    %172 = vector.extract_strided_slice %1 {offsets = [12, 0], sizes = [1, 32], strides = [1, 1]} : vector<16x32xf32> to vector<1x32xf32>
    %173 = vector.broadcast %172 : vector<1x32xf32> to vector<32x32xf32>
    %174 = arith.addf %171, %173 : vector<32x32xf32>
    %175 = vector.extract_strided_slice %1 {offsets = [13, 0], sizes = [1, 32], strides = [1, 1]} : vector<16x32xf32> to vector<1x32xf32>
    %176 = vector.broadcast %175 : vector<1x32xf32> to vector<32x32xf32>
    %177 = arith.mulf %174, %176 : vector<32x32xf32>
    %178 = vector.extract_strided_slice %1 {offsets = [14, 0], sizes = [1, 32], strides = [1, 1]} : vector<16x32xf32> to vector<1x32xf32>
    %179 = vector.broadcast %178 : vector<1x32xf32> to vector<32x32xf32>
    %180 = arith.addf %177, %179 : vector<32x32xf32>
    %181 = arith.addf %122, %180 : vector<32x32xf32>
    %c0_50 = arith.constant 0 : index
    %c0_51 = arith.constant 0 : index
    %182 = vector.load %arg7[%c0_50, %c0_51] : memref<32x32xf32, #tpu.memory_space<vmem>>, vector<32x32xf32>
    tpu.vector_store %arg7[%c0_50, %c0_51], %181 {strides = array<i32>} : memref<32x32xf32, #tpu.memory_space<vmem>>, vector<32x32xf32>,
    return
  }
}

</mosaic_0001>

<llo_original>
// kernel: tpu_custom_call.1
$region0: #{tpu_custom_call.1}
  #allocation0 [shape = 'u32[]', space=smem, size = 0x4, offset = 0x4, fixed_abs, tag = 'smem constant byte address 0x4 - core index']
  #allocation1 [shape = 'u32[144,128]{1,0:T(1,128)}', space=vmem, size = 0x12000, scoped, tag = 'internal scratch']
  %s0 = inlined_call_operand.vmem [shape: f32[32,32], index: 0, kind: input, shape index: {}]
  %s1 = inlined_call_operand.vmem [shape: f32[16,32], index: 1, kind: input, shape index: {}]
  %s2 = inlined_call_operand.vmem [shape: f32[2,64], index: 2, kind: input, shape index: {}]
  %s3 = inlined_call_operand.vmem [shape: bf16[3,32,32], index: 3, kind: input, shape index: {}]
  %s4 = inlined_call_operand.vmem [shape: bf16[544,32], index: 4, kind: input, shape index: {}]
  %s5 = inlined_call_operand.vmem [shape: bf16[2,32,64], index: 5, kind: input, shape index: {}]
  %s6 = inlined_call_operand.vmem [shape: bf16[64,32], index: 6, kind: input, shape index: {}]
  %s7 = inlined_call_operand.hbm [shape: f32[32,32], index: 7, kind: output, shape index: {}]
  %s8 = sld [smem:[#allocation0]]
  $region38: #{tpu_custom_call.1} parent=0
    _
  %s10 = ssub.s32 1, %s8
  %s11 = scalar_select 0, %s10, %s8
  $region1: #{tpu_custom_call.1} parent=0
    #allocation2 [shape = 'u8[16384]{0}', space=vmem, size = 0x4000, scoped, tag = 'output window, operand 0, single buffered']
    #allocation3 [shape = 's32[1]{0}', space=sflag, size = 0x4, scoped, tag = 'scoped memory for tpu_custom_call.1']
    %12 = vsyncpa [#allocation3], 0
    // Predicated region
    $region2: #{tpu_custom_call.1} parent=1 // pred_check
      _
    $region3: #{tpu_custom_call.1} parent=1 // pred_check_branch
      %14 = sbr.rel (0) target = $region5
    $region4: #{tpu_custom_call.1} parent=1 // pred_region
      _
    $region5: #{tpu_custom_call.1} parent=1 // pred_fallthru
      _
    // Predicated region
    $region6: #{tpu_custom_call.1} parent=1 // pred_check
      _
    $region7: #{tpu_custom_call.1} parent=1 // pred_check_branch
      %16 = sbr.rel (0) target = $region9
    $region8: #{tpu_custom_call.1} parent=1 // pred_region
      _
    $region9: #{tpu_custom_call.1} parent=1 // pred_fallthru
      _
    // Predicated region
    $region10: #{tpu_custom_call.1} parent=1 // pred_check
      _
    $region11: #{tpu_custom_call.1} parent=1 // pred_check_branch
      %18 = sbr.rel (0) target = $region13
    $region12: #{tpu_custom_call.1} parent=1 // pred_region
      _
    $region13: #{tpu_custom_call.1} parent=1 // pred_fallthru
      _
    // Predicated region
    $region14: #{tpu_custom_call.1} parent=1 // pred_check
      _
    $region15: #{tpu_custom_call.1} parent=1 // pred_check_branch
      %20 = sbr.rel (0) target = $region17
    $region16: #{tpu_custom_call.1} parent=1 // pred_region
      _
    $region17: #{tpu_custom_call.1} parent=1 // pred_fallthru
      _
    // Predicated region
    $region18: #{tpu_custom_call.1} parent=1 // pred_check
      _
    $region19: #{tpu_custom_call.1} parent=1 // pred_check_branch
      %22 = sbr.rel (0) target = $region21
    $region20: #{tpu_custom_call.1} parent=1 // pred_region
      _
    $region21: #{tpu_custom_call.1} parent=1 // pred_fallthru
      _
    // Predicated region
    $region22: #{tpu_custom_call.1} parent=1 // pred_check
      _
    $region23: #{tpu_custom_call.1} parent=1 // pred_check_branch
      %24 = sbr.rel (0) target = $region25
    $region24: #{tpu_custom_call.1} parent=1 // pred_region
      _
    $region25: #{tpu_custom_call.1} parent=1 // pred_fallthru
      _
    // Predicated region
    $region26: #{tpu_custom_call.1} parent=1 // pred_check
      _
    $region27: #{tpu_custom_call.1} parent=1 // pred_check_branch
      %26 = sbr.rel (0) target = $region29
    $region28: #{tpu_custom_call.1} parent=1 // pred_region
      _
    $region29: #{tpu_custom_call.1} parent=1 // pred_fallthru
      _
    %v28 = vld [vmem:[%s0] sm:$0xff]
    %v29 = vld [vmem:[%s0 + $0x8] sm:$0xff]
    %v30 = vld [vmem:[%s0 + $0x10] sm:$0xff]
    %v31 = vld [vmem:[%s0 + $0x18] sm:$0xff]
    %v32 = vld [vmem:[%s1] sm:$0xff]
    %v33 = vld [vmem:[%s1 + $0x8] sm:$0xff]
    %v34 = vld [vmem:[%s2] sm:$0x3]
    %vm35 = vcmask 261120
    %v36 = vsel %vm35, %v28, 0.0
    %37 = vadd.xlane.f32.xlu0 %v36
    %v38 = vpop.xlane.xlu0 %37
    %v39 = vsel %vm35, %v29, 0.0
    %40 = vadd.xlane.f32.xlu0 %v39
    %v41 = vpop.xlane.xlu0 %40
    %v42 = vsel %vm35, %v30, 0.0
    %43 = vadd.xlane.f32.xlu0 %v42
    %v44 = vpop.xlane.xlu0 %43
    %v45 = vsel %vm35, %v31, 0.0
    %46 = vadd.xlane.f32.xlu0 %v45
    %v47 = vpop.xlane.xlu0 %46
    %v48 = vrcp.pop 32.0
    %v49 = vmul.f32 %v38, %v48
    %v50 = vmul.f32 %v41, %v48
    %v51 = vmul.f32 %v44, %v48
    %v52 = vmul.f32 %v47, %v48
    %v53 = vsub.f32 %v28, %v49
    %v54 = vsub.f32 %v29, %v50
    %v55 = vsub.f32 %v30, %v51
    %v56 = vsub.f32 %v31, %v52
    %v57 = vmul.f32 %v53, %v53
    %v58 = vmul.f32 %v54, %v54
    %v59 = vmul.f32 %v55, %v55
    %v60 = vmul.f32 %v56, %v56
    %v61 = vsel %vm35, %v57, 0.0
    %62 = vadd.xlane.f32.xlu0 %v61
    %v63 = vpop.xlane.xlu0 %62
    %v64 = vsel %vm35, %v58, 0.0
    %65 = vadd.xlane.f32.xlu0 %v64
    %v66 = vpop.xlane.xlu0 %65
    %v67 = vsel %vm35, %v59, 0.0
    %68 = vadd.xlane.f32.xlu0 %v67
    %v69 = vpop.xlane.xlu0 %68
    %v70 = vsel %vm35, %v60, 0.0
    %71 = vadd.xlane.f32.xlu0 %v70
    %v72 = vpop.xlane.xlu0 %71
    %v73 = vmul.f32 %v63, %v48
    %v74 = vmul.f32 %v66, %v48
    %v75 = vmul.f32 %v69, %v48
    %v76 = vmul.f32 %v72, %v48
    %v77 = vadd.f32 %v73, 1e-05
    %v78 = vadd.f32 %v74, 1e-05
    %v79 = vadd.f32 %v75, 1e-05
    %v80 = vadd.f32 %v76, 1e-05
    %v81 = vrsqrt.pop %v77
    %v82 = vrsqrt.pop %v78
    %v83 = vrsqrt.pop %v79
    %v84 = vrsqrt.pop %v80
    %v85 = vmul.f32 %v53, %v81
    %v86 = vmul.f32 %v54, %v82
    %v87 = vmul.f32 %v55, %v83
    %v88 = vmul.f32 %v56, %v84
    %v89 = vlaneseq
    %v90 = vshrl.u32 %v89, 7
    %v91 = vsub.s32 0, %v90
    %v92 = vrot.slane %v32, %v91
    %v93 = vmul.f32 %v85, %v92
    %v94 = vmul.f32 %v86, %v92
    %v95 = vmul.f32 %v87, %v92
    %v96 = vmul.f32 %v88, %v92
    %v97 = vlaneseq
    %v98 = vshrl.u32 %v97, 7
    %v99 = vsub.s32 1, %v98
    %v100 = vrot.slane %v32, %v99
    %v101 = vadd.f32 %v93, %v100
    %v102 = vadd.f32 %v94, %v100
    %v103 = vadd.f32 %v95, %v100
    %v104 = vadd.f32 %v96, %v100
    %v105 = vld [vmem:[%s3] sm:$0xf]
    %v106 = vld [vmem:[%s3 + $0x4] sm:$0xf]
    %v107 = vld [vmem:[%s3 + $0x8] sm:$0xf]
    %v108 = vld [vmem:[%s3 + $0xc] sm:$0xf]
    %v109 = vpack.c.bf16 %v102, %v101
    %v110 = vpack.c.bf16 %v104, %v103
    %v111 = vlaneseq
    %v112 = vshrl.u32 %v111, 7
    %v113 = vsub.s32 2, %v112
    %v114 = vrot.slane %v32, %v113
    %v119 = vunpack.c.l.b16 %v105
    %v120 = vunpack.c.l.b16 %v106
    %v121 = vunpack.c.l.b16 %v107
    %v122 = vunpack.c.l.b16 %v108
    %v123 = vpack.c.b16 %v120, %v119
    %v124 = vpack.c.b16 %v122, %v121
    %v128 = vsel %vm35, %v109, 0
    %v131 = vsel %vm35, %v110, 0
    %133 = vmatprep.subr.bf16.mxu0 0
    %134 = vmatpush1.bf16.msra.mxu0 %v123
    %135 = vmatprep.subr.bf16.mxu0 0
    %136 = vmatpush1.bf16.msra.mxu0 %v124
    %137 = vmatprep.subr.bf16.mxu0 0
    %138 = vmatpush1.bf16.msra.mxu0 0
    %139 = vmatprep.subr.bf16.mxu0 0
    %140 = vmatpush1.bf16.msra.mxu0 0
    %141 = vmatprep.subr.bf16.mxu0 0
    %142 = vmatpush1.bf16.msra.mxu0 0
    %143 = vmatprep.subr.bf16.mxu0 0
    %144 = vmatpush1.bf16.msra.mxu0 0
    %145 = vmatprep.subr.bf16.mxu0 0
    %146 = vmatpush1.bf16.msra.mxu0 0
    %147 = vmatprep.subr.bf16.mxu0 0
    %148 = vmatpush1.bf16.msra.mxu0 0
    %149 = vmatprep.subr.bf16.mxu0 0
    %150 = vmatpush1.bf16.msra.mxu0 0
    %151 = vmatprep.subr.bf16.mxu0 0
    %152 = vmatpush1.bf16.msra.mxu0 0
    %153 = vmatprep.subr.bf16.mxu0 0
    %154 = vmatpush1.bf16.msra.mxu0 0
    %155 = vmatprep.subr.bf16.mxu0 0
    %156 = vmatpush1.bf16.msra.mxu0 0
    %157 = vmatprep.subr.bf16.mxu0 0
    %158 = vmatpush1.bf16.msra.mxu0 0
    %159 = vmatprep.subr.bf16.mxu0 0
    %160 = vmatpush1.bf16.msra.mxu0 0
    %161 = vmatprep.subr.bf16.mxu0 0
    %162 = vmatpush1.bf16.msra.mxu0 0
    %163 = vmatprep.subr.bf16.mxu0 0
    %164 = vmatpush1.bf16.msra.mxu0 0
    %165 = vmatprep.mubr.bf16.mxu0 0
    %166 = vmatmul.mubr.bf16.gmra.mrb[0].mxu0 %v128
    %v167 = vpop.f32.mrb[0].mxu0
    %v168 = vadd.f32 %v114, %v167
    %v169 = vpop.f32.mrb[0].mxu0
    %v170 = vpop.f32.mrb[0].mxu0
    %v171 = vadd.f32 %v114, %v170
    %v172 = vpop.f32.mrb[0].mxu0
    %173 = vmatprep.mubr.bf16.mxu0 0
    %174 = vmatmul.mubr.bf16.gmra.mrb[0].mxu0 %v131
    %v175 = vpop.f32.mrb[0].mxu0
    %v176 = vadd.f32 %v114, %v175
    %v177 = vpop.f32.mrb[0].mxu0
    %v178 = vpop.f32.mrb[0].mxu0
    %v179 = vadd.f32 %v114, %v178
    %v180 = vpop.f32.mrb[0].mxu0
    %181 = vdwg.mxu0
    %s182 = scalar_lea.vmem %s3, 16
    %v183 = vld [vmem:[%s182] sm:$0xf]
    %v184 = vld [vmem:[%s182 + $0x4] sm:$0xf]
    %v185 = vld [vmem:[%s182 + $0x8] sm:$0xf]
    %v186 = vld [vmem:[%s182 + $0xc] sm:$0xf]
    %v187 = vlaneseq
    %v188 = vshrl.u32 %v187, 7
    %v189 = vsub.s32 3, %v188
    %v190 = vrot.slane %v32, %v189
    %v195 = vunpack.c.l.b16 %v183
    %v196 = vunpack.c.l.b16 %v184
    %v197 = vunpack.c.l.b16 %v185
    %v198 = vunpack.c.l.b16 %v186
    %v199 = vpack.c.b16 %v196, %v195
    %v200 = vpack.c.b16 %v198, %v197
    %203 = vmatprep.subr.bf16.mxu0 0
    %204 = vmatpush1.bf16.msra.mxu0 %v199
    %205 = vmatprep.subr.bf16.mxu0 0
    %206 = vmatpush1.bf16.msra.mxu0 %v200
    %207 = vmatprep.subr.bf16.mxu0 0
    %208 = vmatpush1.bf16.msra.mxu0 0
    %209 = vmatprep.subr.bf16.mxu0 0
    %210 = vmatpush1.bf16.msra.mxu0 0
    %211 = vmatprep.subr.bf16.mxu0 0
    %212 = vmatpush1.bf16.msra.mxu0 0
    %213 = vmatprep.subr.bf16.mxu0 0
    %214 = vmatpush1.bf16.msra.mxu0 0
    %215 = vmatprep.subr.bf16.mxu0 0
    %216 = vmatpush1.bf16.msra.mxu0 0
    %217 = vmatprep.subr.bf16.mxu0 0
    %218 = vmatpush1.bf16.msra.mxu0 0
    %219 = vmatprep.subr.bf16.mxu0 0
    %220 = vmatpush1.bf16.msra.mxu0 0
    %221 = vmatprep.subr.bf16.mxu0 0
    %222 = vmatpush1.bf16.msra.mxu0 0
    %223 = vmatprep.subr.bf16.mxu0 0
    %224 = vmatpush1.bf16.msra.mxu0 0
    %225 = vmatprep.subr.bf16.mxu0 0
    %226 = vmatpush1.bf16.msra.mxu0 0
    %227 = vmatprep.subr.bf16.mxu0 0
    %228 = vmatpush1.bf16.msra.mxu0 0
    %229 = vmatprep.subr.bf16.mxu0 0
    %230 = vmatpush1.bf16.msra.mxu0 0
    %231 = vmatprep.subr.bf16.mxu0 0
    %232 = vmatpush1.bf16.msra.mxu0 0
    %233 = vmatprep.subr.bf16.mxu0 0
    %234 = vmatpush1.bf16.msra.mxu0 0
    %235 = vmatprep.mubr.bf16.mxu0 0
    %236 = vmatmul.mubr.bf16.gmra.mrb[0].mxu0 %v128
    %v237 = vpop.f32.mrb[0].mxu0
    %v238 = vadd.f32 %v190, %v237
    %v239 = vpop.f32.mrb[0].mxu0
    %v240 = vpop.f32.mrb[0].mxu0
    %v241 = vadd.f32 %v190, %v240
    %v242 = vpop.f32.mrb[0].mxu0
    %243 = vmatprep.mubr.bf16.mxu0 0
    %244 = vmatmul.mubr.bf16.gmra.mrb[0].mxu0 %v131
    %v245 = vpop.f32.mrb[0].mxu0
    %v246 = vadd.f32 %v190, %v245
    %v247 = vpop.f32.mrb[0].mxu0
    %v248 = vpop.f32.mrb[0].mxu0
    %v249 = vadd.f32 %v190, %v248
    %v250 = vpop.f32.mrb[0].mxu0
    %251 = vdwg.mxu0
    %v252 = vsub.f32 0.0, %v238
    %v253 = vsub.f32 0.0, %v241
    %v254 = vsub.f32 0.0, %v246
    %v255 = vsub.f32 0.0, %v249
    %v256 = vmul.f32 %v252, 1.442695
    %v257 = vpow.pop %v256
    %v258 = vmul.f32 %v253, 1.442695
    %v259 = vpow.pop %v258
    %v260 = vmul.f32 %v254, 1.442695
    %v261 = vpow.pop %v260
    %v262 = vmul.f32 %v255, 1.442695
    %v263 = vpow.pop %v262
    %v264 = vadd.f32 %v257, 1.0
    %v265 = vadd.f32 %v259, 1.0
    %v266 = vadd.f32 %v261, 1.0
    %v267 = vadd.f32 %v263, 1.0
    %v268 = vrcp.pop %v264
    %v269 = vrcp.pop %v265
    %v270 = vrcp.pop %v266
    %v271 = vrcp.pop %v267
    %v272 = vmul.f32 %v238, %v268
    %v273 = vmul.f32 %v241, %v269
    %v274 = vmul.f32 %v246, %v270
    %v275 = vmul.f32 %v249, %v271
    %v276 = vmul.f32 %v168, %v272
    %v277 = vmul.f32 %v171, %v273
    %v278 = vmul.f32 %v176, %v274
    %v279 = vmul.f32 %v179, %v275
    %vm285 = vcmask 1046528
    %v286 = vrot.slane 0.0, 1
    %v287 = vrot.slane %v276, 1
    %v288 = vsel %vm285, %v286, %v287
    %v289 = vrot.slane %v277, 1
    %v290 = vsel %vm285, %v287, %v289
    %v291 = vrot.slane %v278, 1
    %v292 = vsel %vm285, %v286, %v291
    %v293 = vrot.slane %v279, 1
    %v294 = vsel %vm285, %v291, %v293
    %295 = vrot.lane.b32.xlu0 %v288, 32
    %v296 = vpop.permute.xlu0 %295
    %297 = vrot.lane.b32.xlu0 %v290, 32
    %v298 = vpop.permute.xlu0 %297
    %299 = vrot.lane.b32.xlu0 %v292, 32
    %v300 = vpop.permute.xlu0 %299
    %301 = vrot.lane.b32.xlu0 %v294, 32
    %v302 = vpop.permute.xlu0 %301
    %vm307 = vcmask 1045504
    %v308 = vrot.slane 0.0, 2
    %v309 = vrot.slane %v276, 2
    %v310 = vsel %vm307, %v308, %v309
    %v311 = vrot.slane %v277, 2
    %v312 = vsel %vm307, %v309, %v311
    %v313 = vrot.slane %v278, 2
    %v314 = vsel %vm307, %v308, %v313
    %v315 = vrot.slane %v279, 2
    %v316 = vsel %vm307, %v313, %v315
    %317 = vrot.lane.b32.xlu0 %v310, 64
    %v318 = vpop.permute.xlu0 %317
    %319 = vrot.lane.b32.xlu0 %v312, 64
    %v320 = vpop.permute.xlu0 %319
    %321 = vrot.lane.b32.xlu0 %v314, 64
    %v322 = vpop.permute.xlu0 %321
    %323 = vrot.lane.b32.xlu0 %v316, 64
    %v324 = vpop.permute.xlu0 %323
    %vm329 = vcmask 1044480
    %v330 = vrot.slane 0.0, 3
    %v331 = vrot.slane %v276, 3
    %v332 = vsel %vm329, %v330, %v331
    %v333 = vrot.slane %v277, 3
    %v334 = vsel %vm329, %v331, %v333
    %v335 = vrot.slane %v278, 3
    %v336 = vsel %vm329, %v330, %v335
    %v337 = vrot.slane %v279, 3
    %v338 = vsel %vm329, %v335, %v337
    %339 = vrot.lane.b32.xlu0 %v332, 96
    %v340 = vpop.permute.xlu0 %339
    %341 = vrot.lane.b32.xlu0 %v334, 96
    %v342 = vpop.permute.xlu0 %341
    %343 = vrot.lane.b32.xlu0 %v336, 96
    %v344 = vpop.permute.xlu0 %343
    %345 = vrot.lane.b32.xlu0 %v338, 96
    %v346 = vpop.permute.xlu0 %345
    %vm351 = vcmask 1043456
    %v352 = vrot.slane 0.0, 4
    %v353 = vrot.slane %v276, 4
    %v354 = vsel %vm351, %v352, %v353
    %v355 = vrot.slane %v277, 4
    %v356 = vsel %vm351, %v353, %v355
    %v357 = vrot.slane %v278, 4
    %v358 = vsel %vm351, %v352, %v357
    %v359 = vrot.slane %v279, 4
    %v360 = vsel %vm351, %v357, %v359
    %vm365 = vcmask 1042432
    %v366 = vrot.slane 0.0, 5
    %v367 = vrot.slane %v276, 5
    %v368 = vsel %vm365, %v366, %v367
    %v369 = vrot.slane %v277, 5
    %v370 = vsel %vm365, %v367, %v369
    %v371 = vrot.slane %v278, 5
    %v372 = vsel %vm365, %v366, %v371
    %v373 = vrot.slane %v279, 5
    %v374 = vsel %vm365, %v371, %v373
    %375 = vrot.lane.b32.xlu0 %v368, 32
    %v376 = vpop.permute.xlu0 %375
    %377 = vrot.lane.b32.xlu0 %v370, 32
    %v378 = vpop.permute.xlu0 %377
    %379 = vrot.lane.b32.xlu0 %v372, 32
    %v380 = vpop.permute.xlu0 %379
    %381 = vrot.lane.b32.xlu0 %v374, 32
    %v382 = vpop.permute.xlu0 %381
    %vm387 = vcmask 1041408
    %v388 = vrot.slane 0.0, 6
    %v389 = vrot.slane %v276, 6
    %v390 = vsel %vm387, %v388, %v389
    %v391 = vrot.slane %v277, 6
    %v392 = vsel %vm387, %v389, %v391
    %v393 = vrot.slane %v278, 6
    %v394 = vsel %vm387, %v388, %v393
    %v395 = vrot.slane %v279, 6
    %v396 = vsel %vm387, %v393, %v395
    %397 = vrot.lane.b32.xlu0 %v390, 64
    %v398 = vpop.permute.xlu0 %397
    %399 = vrot.lane.b32.xlu0 %v392, 64
    %v400 = vpop.permute.xlu0 %399
    %401 = vrot.lane.b32.xlu0 %v394, 64
    %v402 = vpop.permute.xlu0 %401
    %403 = vrot.lane.b32.xlu0 %v396, 64
    %v404 = vpop.permute.xlu0 %403
    %vm409 = vcmask 1040384
    %v410 = vrot.slane 0.0, 7
    %v411 = vrot.slane %v276, 7
    %v412 = vsel %vm409, %v410, %v411
    %v413 = vrot.slane %v277, 7
    %v414 = vsel %vm409, %v411, %v413
    %v415 = vrot.slane %v278, 7
    %v416 = vsel %vm409, %v410, %v415
    %v417 = vrot.slane %v279, 7
    %v418 = vsel %vm409, %v415, %v417
    %419 = vrot.lane.b32.xlu0 %v412, 96
    %v420 = vpop.permute.xlu0 %419
    %421 = vrot.lane.b32.xlu0 %v414, 96
    %v422 = vpop.permute.xlu0 %421
    %423 = vrot.lane.b32.xlu0 %v416, 96
    %v424 = vpop.permute.xlu0 %423
    %425 = vrot.lane.b32.xlu0 %v418, 96
    %v426 = vpop.permute.xlu0 %425
    %v431 = vsel %vm285, %v289, %v286
    %v432 = vsel %vm285, %v293, %v286
    %433 = vrot.lane.b32.xlu0 %v431, 32
    %v434 = vpop.permute.xlu0 %433
    %435 = vrot.lane.b32.xlu0 %v432, 32
    %v436 = vpop.permute.xlu0 %435
    %v439 = vsel %vm307, %v311, %v308
    %v440 = vsel %vm307, %v315, %v308
    %441 = vrot.lane.b32.xlu0 %v439, 64
    %v442 = vpop.permute.xlu0 %441
    %443 = vrot.lane.b32.xlu0 %v440, 64
    %v444 = vpop.permute.xlu0 %443
    %v447 = vsel %vm329, %v333, %v330
    %v448 = vsel %vm329, %v337, %v330
    %449 = vrot.lane.b32.xlu0 %v447, 96
    %v450 = vpop.permute.xlu0 %449
    %451 = vrot.lane.b32.xlu0 %v448, 96
    %v452 = vpop.permute.xlu0 %451
    %v455 = vsel %vm351, %v355, %v352
    %v456 = vsel %vm351, %v359, %v352
    %v459 = vsel %vm365, %v369, %v366
    %v460 = vsel %vm365, %v373, %v366
    %461 = vrot.lane.b32.xlu0 %v459, 32
    %v462 = vpop.permute.xlu0 %461
    %463 = vrot.lane.b32.xlu0 %v460, 32
    %v464 = vpop.permute.xlu0 %463
    %v467 = vsel %vm387, %v391, %v388
    %v468 = vsel %vm387, %v395, %v388
    %469 = vrot.lane.b32.xlu0 %v467, 64
    %v470 = vpop.permute.xlu0 %469
    %471 = vrot.lane.b32.xlu0 %v468, 64
    %v472 = vpop.permute.xlu0 %471
    %v475 = vsel %vm409, %v413, %v410
    %v476 = vsel %vm409, %v417, %v410
    %477 = vrot.lane.b32.xlu0 %v475, 96
    %v478 = vpop.permute.xlu0 %477
    %479 = vrot.lane.b32.xlu0 %v476, 96
    %v480 = vpop.permute.xlu0 %479
    %v483 = vsel %vm35, 0.0, %v296
    %v484 = vsel %vm35, %v276, %v298
    %v485 = vsel %vm35, 0.0, %v300
    %v486 = vsel %vm35, %v278, %v302
    %vm487 = vcmask 523264
    %v488 = vsel %vm487, %v483, %v318
    %v489 = vsel %vm487, %v484, %v320
    %v490 = vsel %vm487, %v485, %v322
    %v491 = vsel %vm487, %v486, %v324
    %vm492 = vcmask 785408
    %v493 = vsel %vm492, %v488, %v340
    %v494 = vsel %vm492, %v489, %v342
    %v495 = vsel %vm492, %v490, %v344
    %v496 = vsel %vm492, %v491, %v346
    %v497 = vsel %vm35, %v354, %v376
    %v498 = vsel %vm35, %v356, %v378
    %v499 = vsel %vm35, %v358, %v380
    %v500 = vsel %vm35, %v360, %v382
    %v501 = vsel %vm487, %v497, %v398
    %v502 = vsel %vm487, %v498, %v400
    %v503 = vsel %vm487, %v499, %v402
    %v504 = vsel %vm487, %v500, %v404
    %v505 = vsel %vm492, %v501, %v420
    %v506 = vsel %vm492, %v502, %v422
    %v507 = vsel %vm492, %v503, %v424
    %v508 = vsel %vm492, %v504, %v426
    %v509 = vsel %vm35, %v277, %v434
    %v510 = vsel %vm35, %v279, %v436
    %v511 = vsel %vm487, %v509, %v442
    %v512 = vsel %vm487, %v510, %v444
    %v513 = vsel %vm492, %v511, %v450
    %v514 = vsel %vm492, %v512, %v452
    %v515 = vsel %vm35, %v455, %v462
    %v516 = vsel %vm35, %v456, %v464
    %v517 = vsel %vm487, %v515, %v470
    %v518 = vsel %vm487, %v516, %v472
    %v519 = vsel %vm492, %v517, %v478
    %v520 = vsel %vm492, %v518, %v480
    %v521 = vld [vmem:[%s4] sm:$0xf]
    %v522 = vld [vmem:[%s4 + $0x4] sm:$0xf]
    %v523 = vld [vmem:[%s4 + $0x8] sm:$0xf]
    %v524 = vld [vmem:[%s4 + $0xc] sm:$0xf]
    %v525 = vld [vmem:[%s4 + $0x10] sm:$0xf]
    %v526 = vld [vmem:[%s4 + $0x14] sm:$0xf]
    %v527 = vld [vmem:[%s4 + $0x18] sm:$0xf]
    %v528 = vld [vmem:[%s4 + $0x1c] sm:$0xf]
    %v529 = vld [vmem:[%s4 + $0x20] sm:$0xf]
    %v530 = vld [vmem:[%s4 + $0x24] sm:$0xf]
    %v531 = vld [vmem:[%s4 + $0x28] sm:$0xf]
    %v532 = vld [vmem:[%s4 + $0x2c] sm:$0xf]
    %v533 = vld [vmem:[%s4 + $0x30] sm:$0xf]
    %v534 = vld [vmem:[%s4 + $0x34] sm:$0xf]
    %v535 = vld [vmem:[%s4 + $0x38] sm:$0xf]
    %v536 = vld [vmem:[%s4 + $0x3c] sm:$0xf]
    %v537 = vld [vmem:[%s4 + $0x40] sm:$0xf]
    %v538 = vld [vmem:[%s4 + $0x44] sm:$0xf]
    %v539 = vld [vmem:[%s4 + $0x48] sm:$0xf]
    %v540 = vld [vmem:[%s4 + $0x4c] sm:$0xf]
    %v541 = vld [vmem:[%s4 + $0x50] sm:$0xf]
    %v542 = vld [vmem:[%s4 + $0x54] sm:$0xf]
    %v543 = vld [vmem:[%s4 + $0x58] sm:$0xf]
    %v544 = vld [vmem:[%s4 + $0x5c] sm:$0xf]
    %v545 = vld [vmem:[%s4 + $0x60] sm:$0xf]
    %v546 = vld [vmem:[%s4 + $0x64] sm:$0xf]
    %v547 = vld [vmem:[%s4 + $0x68] sm:$0xf]
    %v548 = vld [vmem:[%s4 + $0x6c] sm:$0xf]
    %v549 = vld [vmem:[%s4 + $0x70] sm:$0xf]
    %v550 = vld [vmem:[%s4 + $0x74] sm:$0xf]
    %v551 = vld [vmem:[%s4 + $0x78] sm:$0xf]
    %v552 = vld [vmem:[%s4 + $0x7c] sm:$0xf]
    %v553 = vld [vmem:[%s4 + $0x80] sm:$0xf]
    %v554 = vld [vmem:[%s4 + $0x84] sm:$0xf]
    %v555 = vld [vmem:[%s4 + $0x88] sm:$0xf]
    %v556 = vld [vmem:[%s4 + $0x8c] sm:$0xf]
    %v557 = vld [vmem:[%s4 + $0x90] sm:$0xf]
    %v558 = vld [vmem:[%s4 + $0x94] sm:$0xf]
    %v559 = vld [vmem:[%s4 + $0x98] sm:$0xf]
    %v560 = vld [vmem:[%s4 + $0x9c] sm:$0xf]
    %v561 = vld [vmem:[%s4 + $0xa0] sm:$0xf]
    %v562 = vld [vmem:[%s4 + $0xa4] sm:$0xf]
    %v563 = vld [vmem:[%s4 + $0xa8] sm:$0xf]
    %v564 = vld [vmem:[%s4 + $0xac] sm:$0xf]
    %v565 = vld [vmem:[%s4 + $0xb0] sm:$0xf]
    %v566 = vld [vmem:[%s4 + $0xb4] sm:$0xf]
    %v567 = vld [vmem:[%s4 + $0xb8] sm:$0xf]
    %v568 = vld [vmem:[%s4 + $0xbc] sm:$0xf]
    %v569 = vld [vmem:[%s4 + $0xc0] sm:$0xf]
    %v570 = vld [vmem:[%s4 + $0xc4] sm:$0xf]
    %v571 = vld [vmem:[%s4 + $0xc8] sm:$0xf]
    %v572 = vld [vmem:[%s4 + $0xcc] sm:$0xf]
    %v573 = vld [vmem:[%s4 + $0xd0] sm:$0xf]
    %v574 = vld [vmem:[%s4 + $0xd4] sm:$0xf]
    %v575 = vld [vmem:[%s4 + $0xd8] sm:$0xf]
    %v576 = vld [vmem:[%s4 + $0xdc] sm:$0xf]
    %v577 = vld [vmem:[%s4 + $0xe0] sm:$0xf]
    %v578 = vld [vmem:[%s4 + $0xe4] sm:$0xf]
    %v579 = vld [vmem:[%s4 + $0xe8] sm:$0xf]
    %v580 = vld [vmem:[%s4 + $0xec] sm:$0xf]
    %v581 = vld [vmem:[%s4 + $0xf0] sm:$0xf]
    %v582 = vld [vmem:[%s4 + $0xf4] sm:$0xf]
    %v583 = vld [vmem:[%s4 + $0xf8] sm:$0xf]
    %v584 = vld [vmem:[%s4 + $0xfc] sm:$0xf]
    %v585 = vld [vmem:[%s4 + $0x100] sm:$0xf]
    %v586 = vld [vmem:[%s4 + $0x104] sm:$0xf]
    %v587 = vld [vmem:[%s4 + $0x108] sm:$0xf]
    %v588 = vld [vmem:[%s4 + $0x10c] sm:$0xf]
    %v589 = vpack.c.bf16 %v494, %v493
    %v590 = vpack.c.bf16 %v506, %v505
    %v591 = vpack.c.bf16 %v513, %v494
    %v592 = vpack.c.bf16 %v519, %v506
    %v593 = vpack.c.bf16 0.0, %v277
    %v594 = vpack.c.bf16 %v496, %v495
    %v595 = vpack.c.bf16 %v508, %v507
    %v596 = vpack.c.bf16 %v514, %v496
    %v597 = vpack.c.bf16 %v520, %v508
    %v598 = vpack.c.bf16 0.0, %v279
    %v599 = vlaneseq
    %v600 = vshrl.u32 %v599, 7
    %v601 = vsub.s32 4, %v600
    %v602 = vrot.slane %v32, %v601
    %v671 = vunpack.c.l.b16 %v521
    %v672 = vunpack.c.l.b16 %v522
    %v673 = vunpack.c.l.b16 %v523
    %v674 = vunpack.c.l.b16 %v524
    %v675 = vunpack.c.l.b16 %v525
    %v676 = vunpack.c.l.b16 %v526
    %v677 = vunpack.c.l.b16 %v527
    %v678 = vunpack.c.l.b16 %v528
    %v679 = vunpack.c.l.b16 %v529
    %v680 = vunpack.c.l.b16 %v530
    %v681 = vunpack.c.l.b16 %v531
    %v682 = vunpack.c.l.b16 %v532
    %v683 = vunpack.c.l.b16 %v533
    %v684 = vunpack.c.l.b16 %v534
    %v685 = vunpack.c.l.b16 %v535
    %v686 = vunpack.c.l.b16 %v536
    %v687 = vunpack.c.l.b16 %v537
    %v688 = vunpack.c.l.b16 %v538
    %v689 = vunpack.c.l.b16 %v539
    %v690 = vunpack.c.l.b16 %v540
    %v691 = vunpack.c.l.b16 %v541
    %v692 = vunpack.c.l.b16 %v542
    %v693 = vunpack.c.l.b16 %v543
    %v694 = vunpack.c.l.b16 %v544
    %v695 = vunpack.c.l.b16 %v545
    %v696 = vunpack.c.l.b16 %v546
    %v697 = vunpack.c.l.b16 %v547
    %v698 = vunpack.c.l.b16 %v548
    %v699 = vunpack.c.l.b16 %v549
    %v700 = vunpack.c.l.b16 %v550
    %v701 = vunpack.c.l.b16 %v551
    %v702 = vunpack.c.l.b16 %v552
    %v703 = vunpack.c.l.b16 %v553
    %v704 = vunpack.c.l.b16 %v554
    %v705 = vunpack.c.l.b16 %v555
    %v706 = vunpack.c.l.b16 %v556
    %v707 = vunpack.c.l.b16 %v557
    %v708 = vunpack.c.l.b16 %v558
    %v709 = vunpack.c.l.b16 %v559
    %v710 = vunpack.c.l.b16 %v560
    %v711 = vunpack.c.l.b16 %v561
    %v712 = vunpack.c.l.b16 %v562
    %v713 = vunpack.c.l.b16 %v563
    %v714 = vunpack.c.l.b16 %v564
    %v715 = vunpack.c.l.b16 %v565
    %v716 = vunpack.c.l.b16 %v566
    %v717 = vunpack.c.l.b16 %v567
    %v718 = vunpack.c.l.b16 %v568
    %v719 = vunpack.c.l.b16 %v569
    %v720 = vunpack.c.l.b16 %v570
    %v721 = vunpack.c.l.b16 %v571
    %v722 = vunpack.c.l.b16 %v572
    %v723 = vunpack.c.l.b16 %v573
    %v724 = vunpack.c.l.b16 %v574
    %v725 = vunpack.c.l.b16 %v575
    %v726 = vunpack.c.l.b16 %v576
    %v727 = vunpack.c.l.b16 %v577
    %v728 = vunpack.c.l.b16 %v578
    %v729 = vunpack.c.l.b16 %v579
    %v730 = vunpack.c.l.b16 %v580
    %v731 = vunpack.c.l.b16 %v581
    %v732 = vunpack.c.l.b16 %v582
    %v733 = vunpack.c.l.b16 %v583
    %v734 = vunpack.c.l.b16 %v584
    %v735 = vunpack.c.l.b16 %v585
    %v736 = vunpack.c.l.b16 %v586
    %v737 = vunpack.c.l.b16 %v587
    %v738 = vunpack.c.l.b16 %v588
    %v739 = vpack.c.b16 %v672, %v671
    %v740 = vpack.c.b16 %v674, %v673
    %v741 = vpack.c.b16 %v676, %v675
    %v742 = vpack.c.b16 %v678, %v677
    %v743 = vpack.c.b16 %v680, %v679
    %v744 = vpack.c.b16 %v682, %v681
    %v745 = vpack.c.b16 %v684, %v683
    %v746 = vpack.c.b16 %v686, %v685
    %v747 = vpack.c.b16 %v688, %v687
    %v748 = vpack.c.b16 %v690, %v689
    %v749 = vpack.c.b16 %v692, %v691
    %v750 = vpack.c.b16 %v694, %v693
    %v751 = vpack.c.b16 %v696, %v695
    %v752 = vpack.c.b16 %v698, %v697
    %v753 = vpack.c.b16 %v700, %v699
    %v754 = vpack.c.b16 %v702, %v701
    %v755 = vpack.c.b16 %v704, %v703
    %v756 = vpack.c.b16 %v706, %v705
    %v757 = vpack.c.b16 %v708, %v707
    %v758 = vpack.c.b16 %v710, %v709
    %v759 = vpack.c.b16 %v712, %v711
    %v760 = vpack.c.b16 %v714, %v713
    %v761 = vpack.c.b16 %v716, %v715
    %v762 = vpack.c.b16 %v718, %v717
    %v763 = vpack.c.b16 %v720, %v719
    %v764 = vpack.c.b16 %v722, %v721
    %v765 = vpack.c.b16 %v724, %v723
    %v766 = vpack.c.b16 %v726, %v725
    %v767 = vpack.c.b16 %v728, %v727
    %v768 = vpack.c.b16 %v730, %v729
    %v769 = vpack.c.b16 %v732, %v731
    %v770 = vpack.c.b16 %v734, %v733
    %v771 = vpack.c.b16 %v736, %v735
    %v772 = vpack.c.b16 %v738, %v737
    %v808 = vsel %vm35, %v593, 0
    %v811 = vsel %vm35, %v598, 0
    %813 = vmatprep.subr.bf16.mxu0 0
    %814 = vmatpush1.bf16.msra.mxu0 %v739
    %815 = vmatprep.subr.bf16.mxu0 0
    %816 = vmatpush1.bf16.msra.mxu0 %v740
    %817 = vmatprep.subr.bf16.mxu0 0
    %818 = vmatpush1.bf16.msra.mxu0 %v741
    %819 = vmatprep.subr.bf16.mxu0 0
    %820 = vmatpush1.bf16.msra.mxu0 %v742
    %821 = vmatprep.subr.bf16.mxu0 0
    %822 = vmatpush1.bf16.msra.mxu0 %v743
    %823 = vmatprep.subr.bf16.mxu0 0
    %824 = vmatpush1.bf16.msra.mxu0 %v744
    %825 = vmatprep.subr.bf16.mxu0 0
    %826 = vmatpush1.bf16.msra.mxu0 %v745
    %827 = vmatprep.subr.bf16.mxu0 0
    %828 = vmatpush1.bf16.msra.mxu0 %v746
    %829 = vmatprep.subr.bf16.mxu0 0
    %830 = vmatpush1.bf16.msra.mxu0 %v747
    %831 = vmatprep.subr.bf16.mxu0 0
    %832 = vmatpush1.bf16.msra.mxu0 %v748
    %833 = vmatprep.subr.bf16.mxu0 0
    %834 = vmatpush1.bf16.msra.mxu0 %v749
    %835 = vmatprep.subr.bf16.mxu0 0
    %836 = vmatpush1.bf16.msra.mxu0 %v750
    %837 = vmatprep.subr.bf16.mxu0 0
    %838 = vmatpush1.bf16.msra.mxu0 %v751
    %839 = vmatprep.subr.bf16.mxu0 0
    %840 = vmatpush1.bf16.msra.mxu0 %v752
    %841 = vmatprep.subr.bf16.mxu0 0
    %842 = vmatpush1.bf16.msra.mxu0 %v753
    %843 = vmatprep.subr.bf16.mxu0 0
    %844 = vmatpush1.bf16.msra.mxu0 %v754
    %845 = vmatprep.mubr.bf16.mxu0 %v590
    %846 = vmatmul.mubr.bf16.gmra.mrb[0].mxu0 %v589
    %v847 = vpop.f32.mrb[0].mxu0
    %v848 = vadd.f32 %v602, %v847
    %v849 = vpop.f32.mrb[0].mxu0
    %v850 = vpop.f32.mrb[0].mxu0
    %v851 = vadd.f32 %v602, %v850
    %v852 = vpop.f32.mrb[0].mxu0
    %853 = vmatprep.mubr.bf16.mxu0 %v595
    %854 = vmatmul.mubr.bf16.gmra.mrb[0].mxu0 %v594
    %v855 = vpop.f32.mrb[0].mxu0
    %v856 = vadd.f32 %v602, %v855
    %v857 = vpop.f32.mrb[0].mxu0
    %v858 = vpop.f32.mrb[0].mxu0
    %v859 = vadd.f32 %v602, %v858
    %v860 = vpop.f32.mrb[0].mxu0
    %861 = vdwg.mxu0
    %862 = vmatprep.subr.bf16.mxu0 0
    %863 = vmatpush1.bf16.msra.mxu0 %v755
    %864 = vmatprep.subr.bf16.mxu0 0
    %865 = vmatpush1.bf16.msra.mxu0 %v756
    %866 = vmatprep.subr.bf16.mxu0 0
    %867 = vmatpush1.bf16.msra.mxu0 %v757
    %868 = vmatprep.subr.bf16.mxu0 0
    %869 = vmatpush1.bf16.msra.mxu0 %v758
    %870 = vmatprep.subr.bf16.mxu0 0
    %871 = vmatpush1.bf16.msra.mxu0 %v759
    %872 = vmatprep.subr.bf16.mxu0 0
    %873 = vmatpush1.bf16.msra.mxu0 %v760
    %874 = vmatprep.subr.bf16.mxu0 0
    %875 = vmatpush1.bf16.msra.mxu0 %v761
    %876 = vmatprep.subr.bf16.mxu0 0
    %877 = vmatpush1.bf16.msra.mxu0 %v762
    %878 = vmatprep.subr.bf16.mxu0 0
    %879 = vmatpush1.bf16.msra.mxu0 %v763
    %880 = vmatprep.subr.bf16.mxu0 0
    %881 = vmatpush1.bf16.msra.mxu0 %v764
    %882 = vmatprep.subr.bf16.mxu0 0
    %883 = vmatpush1.bf16.msra.mxu0 %v765
    %884 = vmatprep.subr.bf16.mxu0 0
    %885 = vmatpush1.bf16.msra.mxu0 %v766
    %886 = vmatprep.subr.bf16.mxu0 0
    %887 = vmatpush1.bf16.msra.mxu0 %v767
    %888 = vmatprep.subr.bf16.mxu0 0
    %889 = vmatpush1.bf16.msra.mxu0 %v768
    %890 = vmatprep.subr.bf16.mxu0 0
    %891 = vmatpush1.bf16.msra.mxu0 %v769
    %892 = vmatprep.subr.bf16.mxu0 0
    %893 = vmatpush1.bf16.msra.mxu0 %v770
    %894 = vmatprep.mubr.bf16.mxu0 %v592
    %895 = vmatmul.mubr.bf16.gmra.mrb[0].mxu0 %v591
    %v896 = vpop.f32.mrb[0].mxu0
    %v897 = vadd.f32 %v848, %v896
    %v898 = vpop.f32.mrb[0].mxu0
    %v899 = vpop.f32.mrb[0].mxu0
    %v900 = vadd.f32 %v851, %v899
    %v901 = vpop.f32.mrb[0].mxu0
    %902 = vmatprep.mubr.bf16.mxu0 %v597
    %903 = vmatmul.mubr.bf16.gmra.mrb[0].mxu0 %v596
    %v904 = vpop.f32.mrb[0].mxu0
    %v905 = vadd.f32 %v856, %v904
    %v906 = vpop.f32.mrb[0].mxu0
    %v907 = vpop.f32.mrb[0].mxu0
    %v908 = vadd.f32 %v859, %v907
    %v909 = vpop.f32.mrb[0].mxu0
    %910 = vdwg.mxu0
    %911 = vmatprep.subr.bf16.mxu0 0
    %912 = vmatpush1.bf16.msra.mxu0 %v771
    %913 = vmatprep.subr.bf16.mxu0 0
    %914 = vmatpush1.bf16.msra.mxu0 %v772
    %915 = vmatprep.subr.bf16.mxu0 0
    %916 = vmatpush1.bf16.msra.mxu0 0
    %917 = vmatprep.subr.bf16.mxu0 0
    %918 = vmatpush1.bf16.msra.mxu0 0
    %919 = vmatprep.subr.bf16.mxu0 0
    %920 = vmatpush1.bf16.msra.mxu0 0
    %921 = vmatprep.subr.bf16.mxu0 0
    %922 = vmatpush1.bf16.msra.mxu0 0
    %923 = vmatprep.subr.bf16.mxu0 0
    %924 = vmatpush1.bf16.msra.mxu0 0
    %925 = vmatprep.subr.bf16.mxu0 0
    %926 = vmatpush1.bf16.msra.mxu0 0
    %927 = vmatprep.subr.bf16.mxu0 0
    %928 = vmatpush1.bf16.msra.mxu0 0
    %929 = vmatprep.subr.bf16.mxu0 0
    %930 = vmatpush1.bf16.msra.mxu0 0
    %931 = vmatprep.subr.bf16.mxu0 0
    %932 = vmatpush1.bf16.msra.mxu0 0
    %933 = vmatprep.subr.bf16.mxu0 0
    %934 = vmatpush1.bf16.msra.mxu0 0
    %935 = vmatprep.subr.bf16.mxu0 0
    %936 = vmatpush1.bf16.msra.mxu0 0
    %937 = vmatprep.subr.bf16.mxu0 0
    %938 = vmatpush1.bf16.msra.mxu0 0
    %939 = vmatprep.subr.bf16.mxu0 0
    %940 = vmatpush1.bf16.msra.mxu0 0
    %941 = vmatprep.subr.bf16.mxu0 0
    %942 = vmatpush1.bf16.msra.mxu0 0
    %943 = vmatprep.mubr.bf16.mxu0 0
    %944 = vmatmul.mubr.bf16.gmra.mrb[0].mxu0 %v808
    %v945 = vpop.f32.mrb[0].mxu0
    %v946 = vadd.f32 %v897, %v945
    %v947 = vpop.f32.mrb[0].mxu0
    %v948 = vpop.f32.mrb[0].mxu0
    %v949 = vadd.f32 %v900, %v948
    %v950 = vpop.f32.mrb[0].mxu0
    %951 = vmatprep.mubr.bf16.mxu0 0
    %952 = vmatmul.mubr.bf16.gmra.mrb[0].mxu0 %v811
    %v953 = vpop.f32.mrb[0].mxu0
    %v954 = vadd.f32 %v905, %v953
    %v955 = vpop.f32.mrb[0].mxu0
    %v956 = vpop.f32.mrb[0].mxu0
    %v957 = vadd.f32 %v908, %v956
    %v958 = vpop.f32.mrb[0].mxu0
    %959 = vdwg.mxu0
    %v960 = vsel %vm35, %v946, 0.0
    %v961 = vsel %vm35, %v949, 0.0
    %v962 = vadd.f32 %v960, %v961
    %v963 = vsel %vm35, %v954, 0.0
    %v964 = vadd.f32 %v962, %v963
    %v965 = vsel %vm35, %v957, 0.0
    %v966 = vadd.f32 %v964, %v965
    %v967 = vrot.slane %v966, 4
    %v968 = vadd.f32 %v966, %v967
    %v969 = vrot.slane %v968, 2
    %v970 = vadd.f32 %v968, %v969
    %v971 = vrot.slane %v970, 1
    %v972 = vadd.f32 %v970, %v971
    %v973 = vmul.f32 %v972, %v48
    %v974 = vsub.f32 %v946, %v973
    %v975 = vsub.f32 %v949, %v973
    %v976 = vsub.f32 %v954, %v973
    %v977 = vsub.f32 %v957, %v973
    %v978 = vmul.f32 %v974, %v974
    %v979 = vmul.f32 %v975, %v975
    %v980 = vmul.f32 %v976, %v976
    %v981 = vmul.f32 %v977, %v977
    %v982 = vsel %vm35, %v978, 0.0
    %v983 = vsel %vm35, %v979, 0.0
    %v984 = vadd.f32 %v982, %v983
    %v985 = vsel %vm35, %v980, 0.0
    %v986 = vadd.f32 %v984, %v985
    %v987 = vsel %vm35, %v981, 0.0
    %v988 = vadd.f32 %v986, %v987
    %v989 = vrot.slane %v988, 4
    %v990 = vadd.f32 %v988, %v989
    %v991 = vrot.slane %v990, 2
    %v992 = vadd.f32 %v990, %v991
    %v993 = vrot.slane %v992, 1
    %v994 = vadd.f32 %v992, %v993
    %v995 = vmul.f32 %v994, %v48
    %v996 = vadd.f32 %v995, 1e-05
    %v997 = vrsqrt.pop %v996
    %v998 = vmul.f32 %v974, %v997
    %v999 = vmul.f32 %v975, %v997
    %v1000 = vmul.f32 %v976, %v997
    %v1001 = vmul.f32 %v977, %v997
    %v1002 = vlaneseq
    %v1003 = vshrl.u32 %v1002, 7
    %v1004 = vsub.s32 5, %v1003
    %v1005 = vrot.slane %v32, %v1004
    %v1006 = vmul.f32 %v998, %v1005
    %v1007 = vmul.f32 %v999, %v1005
    %v1008 = vmul.f32 %v1000, %v1005
    %v1009 = vmul.f32 %v1001, %v1005
    %v1010 = vlaneseq
    %v1011 = vshrl.u32 %v1010, 7
    %v1012 = vsub.s32 6, %v1011
    %v1013 = vrot.slane %v32, %v1012
    %v1014 = vadd.f32 %v1006, %v1013
    %v1015 = vadd.f32 %v1007, %v1013
    %v1016 = vadd.f32 %v1008, %v1013
    %v1017 = vadd.f32 %v1009, %v1013
    %v1018 = vsub.f32 0.0, %v1014
    %v1019 = vsub.f32 0.0, %v1015
    %v1020 = vsub.f32 0.0, %v1016
    %v1021 = vsub.f32 0.0, %v1017
    %v1022 = vmul.f32 %v1018, 1.442695
    %v1023 = vpow.pop %v1022
    %v1024 = vmul.f32 %v1019, 1.442695
    %v1025 = vpow.pop %v1024
    %v1026 = vmul.f32 %v1020, 1.442695
    %v1027 = vpow.pop %v1026
    %v1028 = vmul.f32 %v1021, 1.442695
    %v1029 = vpow.pop %v1028
    %v1030 = vadd.f32 %v1023, 1.0
    %v1031 = vadd.f32 %v1025, 1.0
    %v1032 = vadd.f32 %v1027, 1.0
    %v1033 = vadd.f32 %v1029, 1.0
    %v1034 = vrcp.pop %v1030
    %v1035 = vrcp.pop %v1031
    %v1036 = vrcp.pop %v1032
    %v1037 = vrcp.pop %v1033
    %v1038 = vmul.f32 %v1014, %v1034
    %v1039 = vmul.f32 %v1015, %v1035
    %v1040 = vmul.f32 %v1016, %v1036
    %v1041 = vmul.f32 %v1017, %v1037
    %s1042 = scalar_lea.vmem %s3, 32
    %v1043 = vld [vmem:[%s1042] sm:$0xf]
    %v1044 = vld [vmem:[%s1042 + $0x4] sm:$0xf]
    %v1045 = vld [vmem:[%s1042 + $0x8] sm:$0xf]
    %v1046 = vld [vmem:[%s1042 + $0xc] sm:$0xf]
    %v1047 = vpack.c.bf16 %v1039, %v1038
    %v1048 = vpack.c.bf16 %v1041, %v1040
    %v1049 = vlaneseq
    %v1050 = vshrl.u32 %v1049, 7
    %v1051 = vsub.s32 7, %v1050
    %v1052 = vrot.slane %v32, %v1051
    %v1057 = vunpack.c.l.b16 %v1043
    %v1058 = vunpack.c.l.b16 %v1044
    %v1059 = vunpack.c.l.b16 %v1045
    %v1060 = vunpack.c.l.b16 %v1046
    %v1061 = vpack.c.b16 %v1058, %v1057
    %v1062 = vpack.c.b16 %v1060, %v1059
    %v1066 = vsel %vm35, %v1047, 0
    %v1069 = vsel %vm35, %v1048, 0
    %1071 = vmatprep.subr.bf16.mxu0 0
    %1072 = vmatpush1.bf16.msra.mxu0 %v1061
    %1073 = vmatprep.subr.bf16.mxu0 0
    %1074 = vmatpush1.bf16.msra.mxu0 %v1062
    %1075 = vmatprep.subr.bf16.mxu0 0
    %1076 = vmatpush1.bf16.msra.mxu0 0
    %1077 = vmatprep.subr.bf16.mxu0 0
    %1078 = vmatpush1.bf16.msra.mxu0 0
    %1079 = vmatprep.subr.bf16.mxu0 0
    %1080 = vmatpush1.bf16.msra.mxu0 0
    %1081 = vmatprep.subr.bf16.mxu0 0
    %1082 = vmatpush1.bf16.msra.mxu0 0
    %1083 = vmatprep.subr.bf16.mxu0 0
    %1084 = vmatpush1.bf16.msra.mxu0 0
    %1085 = vmatprep.subr.bf16.mxu0 0
    %1086 = vmatpush1.bf16.msra.mxu0 0
    %1087 = vmatprep.subr.bf16.mxu0 0
    %1088 = vmatpush1.bf16.msra.mxu0 0
    %1089 = vmatprep.subr.bf16.mxu0 0
    %1090 = vmatpush1.bf16.msra.mxu0 0
    %1091 = vmatprep.subr.bf16.mxu0 0
    %1092 = vmatpush1.bf16.msra.mxu0 0
    %1093 = vmatprep.subr.bf16.mxu0 0
    %1094 = vmatpush1.bf16.msra.mxu0 0
    %1095 = vmatprep.subr.bf16.mxu0 0
    %1096 = vmatpush1.bf16.msra.mxu0 0
    %1097 = vmatprep.subr.bf16.mxu0 0
    %1098 = vmatpush1.bf16.msra.mxu0 0
    %1099 = vmatprep.subr.bf16.mxu0 0
    %1100 = vmatpush1.bf16.msra.mxu0 0
    %1101 = vmatprep.subr.bf16.mxu0 0
    %1102 = vmatpush1.bf16.msra.mxu0 0
    %1103 = vmatprep.mubr.bf16.mxu0 0
    %1104 = vmatmul.mubr.bf16.gmra.mrb[0].mxu0 %v1066
    %v1105 = vpop.f32.mrb[0].mxu0
    %v1106 = vadd.f32 %v1052, %v1105
    %v1107 = vpop.f32.mrb[0].mxu0
    %v1108 = vpop.f32.mrb[0].mxu0
    %v1109 = vadd.f32 %v1052, %v1108
    %v1110 = vpop.f32.mrb[0].mxu0
    %1111 = vmatprep.mubr.bf16.mxu0 0
    %1112 = vmatmul.mubr.bf16.gmra.mrb[0].mxu0 %v1069
    %v1113 = vpop.f32.mrb[0].mxu0
    %v1114 = vadd.f32 %v1052, %v1113
    %v1115 = vpop.f32.mrb[0].mxu0
    %v1116 = vpop.f32.mrb[0].mxu0
    %v1117 = vadd.f32 %v1052, %v1116
    %v1118 = vpop.f32.mrb[0].mxu0
    %1119 = vdwg.mxu0
    %v1120 = vlaneseq
    %v1121 = vshrl.u32 %v1120, 7
    %v1122 = vsub.s32 0, %v1121
    %v1123 = vrot.slane %v33, %v1122
    %v1124 = vmul.f32 %v1106, %v1123
    %v1125 = vmul.f32 %v1109, %v1123
    %v1126 = vmul.f32 %v1114, %v1123
    %v1127 = vmul.f32 %v1117, %v1123
    %v1128 = vlaneseq
    %v1129 = vshrl.u32 %v1128, 7
    %v1130 = vsub.s32 1, %v1129
    %v1131 = vrot.slane %v33, %v1130
    %v1132 = vadd.f32 %v1124, %v1131
    %v1133 = vadd.f32 %v1125, %v1131
    %v1134 = vadd.f32 %v1126, %v1131
    %v1135 = vadd.f32 %v1127, %v1131
    %v1136 = vadd.f32 %v1132, %v28
    %v1137 = vadd.f32 %v1133, %v29
    %v1138 = vadd.f32 %v1134, %v30
    %v1139 = vadd.f32 %v1135, %v31
    %v1140 = vsel %vm35, %v1136, 0.0
    %1141 = vadd.xlane.f32.xlu0 %v1140
    %v1142 = vpop.xlane.xlu0 %1141
    %v1143 = vsel %vm35, %v1137, 0.0
    %1144 = vadd.xlane.f32.xlu0 %v1143
    %v1145 = vpop.xlane.xlu0 %1144
    %v1146 = vsel %vm35, %v1138, 0.0
    %1147 = vadd.xlane.f32.xlu0 %v1146
    %v1148 = vpop.xlane.xlu0 %1147
    %v1149 = vsel %vm35, %v1139, 0.0
    %1150 = vadd.xlane.f32.xlu0 %v1149
    %v1151 = vpop.xlane.xlu0 %1150
    %v1152 = vmul.f32 %v1142, %v48
    %v1153 = vmul.f32 %v1145, %v48
    %v1154 = vmul.f32 %v1148, %v48
    %v1155 = vmul.f32 %v1151, %v48
    %v1156 = vsub.f32 %v1136, %v1152
    %v1157 = vsub.f32 %v1137, %v1153
    %v1158 = vsub.f32 %v1138, %v1154
    %v1159 = vsub.f32 %v1139, %v1155
    %v1160 = vmul.f32 %v1156, %v1156
    %v1161 = vmul.f32 %v1157, %v1157
    %v1162 = vmul.f32 %v1158, %v1158
    %v1163 = vmul.f32 %v1159, %v1159
    %v1164 = vsel %vm35, %v1160, 0.0
    %1165 = vadd.xlane.f32.xlu0 %v1164
    %v1166 = vpop.xlane.xlu0 %1165
    %v1167 = vsel %vm35, %v1161, 0.0
    %1168 = vadd.xlane.f32.xlu0 %v1167
    %v1169 = vpop.xlane.xlu0 %1168
    %v1170 = vsel %vm35, %v1162, 0.0
    %1171 = vadd.xlane.f32.xlu0 %v1170
    %v1172 = vpop.xlane.xlu0 %1171
    %v1173 = vsel %vm35, %v1163, 0.0
    %1174 = vadd.xlane.f32.xlu0 %v1173
    %v1175 = vpop.xlane.xlu0 %1174
    %v1176 = vmul.f32 %v1166, %v48
    %v1177 = vmul.f32 %v1169, %v48
    %v1178 = vmul.f32 %v1172, %v48
    %v1179 = vmul.f32 %v1175, %v48
    %v1180 = vadd.f32 %v1176, 1e-05
    %v1181 = vadd.f32 %v1177, 1e-05
    %v1182 = vadd.f32 %v1178, 1e-05
    %v1183 = vadd.f32 %v1179, 1e-05
    %v1184 = vrsqrt.pop %v1180
    %v1185 = vrsqrt.pop %v1181
    %v1186 = vrsqrt.pop %v1182
    %v1187 = vrsqrt.pop %v1183
    %v1188 = vmul.f32 %v1156, %v1184
    %v1189 = vmul.f32 %v1157, %v1185
    %v1190 = vmul.f32 %v1158, %v1186
    %v1191 = vmul.f32 %v1159, %v1187
    %v1192 = vlaneseq
    %v1193 = vshrl.u32 %v1192, 7
    %v1194 = vsub.s32 2, %v1193
    %v1195 = vrot.slane %v33, %v1194
    %v1196 = vmul.f32 %v1188, %v1195
    %v1197 = vmul.f32 %v1189, %v1195
    %v1198 = vmul.f32 %v1190, %v1195
    %v1199 = vmul.f32 %v1191, %v1195
    %v1200 = vlaneseq
    %v1201 = vshrl.u32 %v1200, 7
    %v1202 = vsub.s32 3, %v1201
    %v1203 = vrot.slane %v33, %v1202
    %v1204 = vadd.f32 %v1196, %v1203
    %v1205 = vadd.f32 %v1197, %v1203
    %v1206 = vadd.f32 %v1198, %v1203
    %v1207 = vadd.f32 %v1199, %v1203
    %v1208 = vld [vmem:[%s5] sm:$0xf]
    %v1209 = vld [vmem:[%s5 + $0x4] sm:$0xf]
    %v1210 = vld [vmem:[%s5 + $0x8] sm:$0xf]
    %v1211 = vld [vmem:[%s5 + $0xc] sm:$0xf]
    %v1212 = vpack.c.bf16 %v1205, %v1204
    %v1213 = vpack.c.bf16 %v1207, %v1206
    %v1214 = vlaneseq
    %v1215 = vshrl.u32 %v1214, 7
    %v1216 = vsub.s32 0, %v1215
    %v1217 = vrot.slane %v34, %v1216
    %v1222 = vunpack.c.l.b16 %v1208
    %v1223 = vunpack.c.l.b16 %v1209
    %v1224 = vunpack.c.l.b16 %v1210
    %v1225 = vunpack.c.l.b16 %v1211
    %v1226 = vpack.c.b16 %v1223, %v1222
    %v1227 = vpack.c.b16 %v1225, %v1224
    %v1231 = vsel %vm35, %v1212, 0
    %v1234 = vsel %vm35, %v1213, 0
    %1236 = vmatprep.subr.bf16.mxu0 0
    %1237 = vmatpush1.bf16.msra.mxu0 %v1226
    %1238 = vmatprep.subr.bf16.mxu0 0
    %1239 = vmatpush1.bf16.msra.mxu0 %v1227
    %1240 = vmatprep.subr.bf16.mxu0 0
    %1241 = vmatpush1.bf16.msra.mxu0 0
    %1242 = vmatprep.subr.bf16.mxu0 0
    %1243 = vmatpush1.bf16.msra.mxu0 0
    %1244 = vmatprep.subr.bf16.mxu0 0
    %1245 = vmatpush1.bf16.msra.mxu0 0
    %1246 = vmatprep.subr.bf16.mxu0 0
    %1247 = vmatpush1.bf16.msra.mxu0 0
    %1248 = vmatprep.subr.bf16.mxu0 0
    %1249 = vmatpush1.bf16.msra.mxu0 0
    %1250 = vmatprep.subr.bf16.mxu0 0
    %1251 = vmatpush1.bf16.msra.mxu0 0
    %1252 = vmatprep.subr.bf16.mxu0 0
    %1253 = vmatpush1.bf16.msra.mxu0 0
    %1254 = vmatprep.subr.bf16.mxu0 0
    %1255 = vmatpush1.bf16.msra.mxu0 0
    %1256 = vmatprep.subr.bf16.mxu0 0
    %1257 = vmatpush1.bf16.msra.mxu0 0
    %1258 = vmatprep.subr.bf16.mxu0 0
    %1259 = vmatpush1.bf16.msra.mxu0 0
    %1260 = vmatprep.subr.bf16.mxu0 0
    %1261 = vmatpush1.bf16.msra.mxu0 0
    %1262 = vmatprep.subr.bf16.mxu0 0
    %1263 = vmatpush1.bf16.msra.mxu0 0
    %1264 = vmatprep.subr.bf16.mxu0 0
    %1265 = vmatpush1.bf16.msra.mxu0 0
    %1266 = vmatprep.subr.bf16.mxu0 0
    %1267 = vmatpush1.bf16.msra.mxu0 0
    %1268 = vmatprep.mubr.bf16.mxu0 0
    %1269 = vmatmul.mubr.bf16.gmra.mrb[0].mxu0 %v1231
    %v1270 = vpop.f32.mrb[0].mxu0
    %v1271 = vadd.f32 %v1217, %v1270
    %v1272 = vpop.f32.mrb[0].mxu0
    %v1273 = vpop.f32.mrb[0].mxu0
    %v1274 = vadd.f32 %v1217, %v1273
    %v1275 = vpop.f32.mrb[0].mxu0
    %1276 = vmatprep.mubr.bf16.mxu0 0
    %1277 = vmatmul.mubr.bf16.gmra.mrb[0].mxu0 %v1234
    %v1278 = vpop.f32.mrb[0].mxu0
    %v1279 = vadd.f32 %v1217, %v1278
    %v1280 = vpop.f32.mrb[0].mxu0
    %v1281 = vpop.f32.mrb[0].mxu0
    %v1282 = vadd.f32 %v1217, %v1281
    %v1283 = vpop.f32.mrb[0].mxu0
    %1284 = vdwg.mxu0
    %s1285 = scalar_lea.vmem %s5, 16
    %v1286 = vld [vmem:[%s1285] sm:$0xf]
    %v1287 = vld [vmem:[%s1285 + $0x4] sm:$0xf]
    %v1288 = vld [vmem:[%s1285 + $0x8] sm:$0xf]
    %v1289 = vld [vmem:[%s1285 + $0xc] sm:$0xf]
    %v1290 = vlaneseq
    %v1291 = vshrl.u32 %v1290, 7
    %v1292 = vsub.s32 1, %v1291
    %v1293 = vrot.slane %v34, %v1292
    %v1298 = vunpack.c.l.b16 %v1286
    %v1299 = vunpack.c.l.b16 %v1287
    %v1300 = vunpack.c.l.b16 %v1288
    %v1301 = vunpack.c.l.b16 %v1289
    %v1302 = vpack.c.b16 %v1299, %v1298
    %v1303 = vpack.c.b16 %v1301, %v1300
    %1306 = vmatprep.subr.bf16.mxu0 0
    %1307 = vmatpush1.bf16.msra.mxu0 %v1302
    %1308 = vmatprep.subr.bf16.mxu0 0
    %1309 = vmatpush1.bf16.msra.mxu0 %v1303
    %1310 = vmatprep.subr.bf16.mxu0 0
    %1311 = vmatpush1.bf16.msra.mxu0 0
    %1312 = vmatprep.subr.bf16.mxu0 0
    %1313 = vmatpush1.bf16.msra.mxu0 0
    %1314 = vmatprep.subr.bf16.mxu0 0
    %1315 = vmatpush1.bf16.msra.mxu0 0
    %1316 = vmatprep.subr.bf16.mxu0 0
    %1317 = vmatpush1.bf16.msra.mxu0 0
    %1318 = vmatprep.subr.bf16.mxu0 0
    %1319 = vmatpush1.bf16.msra.mxu0 0
    %1320 = vmatprep.subr.bf16.mxu0 0
    %1321 = vmatpush1.bf16.msra.mxu0 0
    %1322 = vmatprep.subr.bf16.mxu0 0
    %1323 = vmatpush1.bf16.msra.mxu0 0
    %1324 = vmatprep.subr.bf16.mxu0 0
    %1325 = vmatpush1.bf16.msra.mxu0 0
    %1326 = vmatprep.subr.bf16.mxu0 0
    %1327 = vmatpush1.bf16.msra.mxu0 0
    %1328 = vmatprep.subr.bf16.mxu0 0
    %1329 = vmatpush1.bf16.msra.mxu0 0
    %1330 = vmatprep.subr.bf16.mxu0 0
    %1331 = vmatpush1.bf16.msra.mxu0 0
    %1332 = vmatprep.subr.bf16.mxu0 0
    %1333 = vmatpush1.bf16.msra.mxu0 0
    %1334 = vmatprep.subr.bf16.mxu0 0
    %1335 = vmatpush1.bf16.msra.mxu0 0
    %1336 = vmatprep.subr.bf16.mxu0 0
    %1337 = vmatpush1.bf16.msra.mxu0 0
    %1338 = vmatprep.mubr.bf16.mxu0 0
    %1339 = vmatmul.mubr.bf16.gmra.mrb[0].mxu0 %v1231
    %v1340 = vpop.f32.mrb[0].mxu0
    %v1341 = vadd.f32 %v1293, %v1340
    %v1342 = vpop.f32.mrb[0].mxu0
    %v1343 = vpop.f32.mrb[0].mxu0
    %v1344 = vadd.f32 %v1293, %v1343
    %v1345 = vpop.f32.mrb[0].mxu0
    %1346 = vmatprep.mubr.bf16.mxu0 0
    %1347 = vmatmul.mubr.bf16.gmra.mrb[0].mxu0 %v1234
    %v1348 = vpop.f32.mrb[0].mxu0
    %v1349 = vadd.f32 %v1293, %v1348
    %v1350 = vpop.f32.mrb[0].mxu0
    %v1351 = vpop.f32.mrb[0].mxu0
    %v1352 = vadd.f32 %v1293, %v1351
    %v1353 = vpop.f32.mrb[0].mxu0
    %1354 = vdwg.mxu0
    %v1355 = vsub.f32 0.0, %v1341
    %v1356 = vsub.f32 0.0, %v1344
    %v1357 = vsub.f32 0.0, %v1349
    %v1358 = vsub.f32 0.0, %v1352
    %v1359 = vmul.f32 %v1355, 1.442695
    %v1360 = vpow.pop %v1359
    %v1361 = vmul.f32 %v1356, 1.442695
    %v1362 = vpow.pop %v1361
    %v1363 = vmul.f32 %v1357, 1.442695
    %v1364 = vpow.pop %v1363
    %v1365 = vmul.f32 %v1358, 1.442695
    %v1366 = vpow.pop %v1365
    %v1367 = vadd.f32 %v1360, 1.0
    %v1368 = vadd.f32 %v1362, 1.0
    %v1369 = vadd.f32 %v1364, 1.0
    %v1370 = vadd.f32 %v1366, 1.0
    %v1371 = vrcp.pop %v1367
    %v1372 = vrcp.pop %v1368
    %v1373 = vrcp.pop %v1369
    %v1374 = vrcp.pop %v1370
    %v1375 = vmul.f32 %v1341, %v1371
    %v1376 = vmul.f32 %v1344, %v1372
    %v1377 = vmul.f32 %v1349, %v1373
    %v1378 = vmul.f32 %v1352, %v1374
    %v1379 = vmul.f32 %v1271, %v1375
    %v1380 = vmul.f32 %v1274, %v1376
    %v1381 = vmul.f32 %v1279, %v1377
    %v1382 = vmul.f32 %v1282, %v1378
    %v1383 = vld [vmem:[%s6] sm:$0xf]
    %v1384 = vld [vmem:[%s6 + $0x4] sm:$0xf]
    %v1385 = vld [vmem:[%s6 + $0x8] sm:$0xf]
    %v1386 = vld [vmem:[%s6 + $0xc] sm:$0xf]
    %v1387 = vld [vmem:[%s6 + $0x10] sm:$0xf]
    %v1388 = vld [vmem:[%s6 + $0x14] sm:$0xf]
    %v1389 = vld [vmem:[%s6 + $0x18] sm:$0xf]
    %v1390 = vld [vmem:[%s6 + $0x1c] sm:$0xf]
    %v1391 = vpack.c.bf16 %v1380, %v1379
    %v1392 = vpack.c.bf16 %v1382, %v1381
    %v1393 = vlaneseq
    %v1394 = vshrl.u32 %v1393, 7
    %v1395 = vsub.s32 4, %v1394
    %v1396 = vrot.slane %v33, %v1395
    %v1405 = vunpack.c.l.b16 %v1383
    %v1406 = vunpack.c.l.b16 %v1384
    %v1407 = vunpack.c.l.b16 %v1385
    %v1408 = vunpack.c.l.b16 %v1386
    %v1409 = vunpack.c.l.b16 %v1387
    %v1410 = vunpack.c.l.b16 %v1388
    %v1411 = vunpack.c.l.b16 %v1389
    %v1412 = vunpack.c.l.b16 %v1390
    %v1413 = vpack.c.b16 %v1406, %v1405
    %v1414 = vpack.c.b16 %v1408, %v1407
    %v1415 = vpack.c.b16 %v1410, %v1409
    %v1416 = vpack.c.b16 %v1412, %v1411
    %v1422 = vsel %vm487, %v1391, 0
    %v1425 = vsel %vm487, %v1392, 0
    %1427 = vmatprep.subr.bf16.mxu0 0
    %1428 = vmatpush1.bf16.msra.mxu0 %v1413
    %1429 = vmatprep.subr.bf16.mxu0 0
    %1430 = vmatpush1.bf16.msra.mxu0 %v1414
    %1431 = vmatprep.subr.bf16.mxu0 0
    %1432 = vmatpush1.bf16.msra.mxu0 %v1415
    %1433 = vmatprep.subr.bf16.mxu0 0
    %1434 = vmatpush1.bf16.msra.mxu0 %v1416
    %1435 = vmatprep.subr.bf16.mxu0 0
    %1436 = vmatpush1.bf16.msra.mxu0 0
    %1437 = vmatprep.subr.bf16.mxu0 0
    %1438 = vmatpush1.bf16.msra.mxu0 0
    %1439 = vmatprep.subr.bf16.mxu0 0
    %1440 = vmatpush1.bf16.msra.mxu0 0
    %1441 = vmatprep.subr.bf16.mxu0 0
    %1442 = vmatpush1.bf16.msra.mxu0 0
    %1443 = vmatprep.subr.bf16.mxu0 0
    %1444 = vmatpush1.bf16.msra.mxu0 0
    %1445 = vmatprep.subr.bf16.mxu0 0
    %1446 = vmatpush1.bf16.msra.mxu0 0
    %1447 = vmatprep.subr.bf16.mxu0 0
    %1448 = vmatpush1.bf16.msra.mxu0 0
    %1449 = vmatprep.subr.bf16.mxu0 0
    %1450 = vmatpush1.bf16.msra.mxu0 0
    %1451 = vmatprep.subr.bf16.mxu0 0
    %1452 = vmatpush1.bf16.msra.mxu0 0
    %1453 = vmatprep.subr.bf16.mxu0 0
    %1454 = vmatpush1.bf16.msra.mxu0 0
    %1455 = vmatprep.subr.bf16.mxu0 0
    %1456 = vmatpush1.bf16.msra.mxu0 0
    %1457 = vmatprep.subr.bf16.mxu0 0
    %1458 = vmatpush1.bf16.msra.mxu0 0
    %1459 = vmatprep.mubr.bf16.mxu0 0
    %1460 = vmatmul.mubr.bf16.gmra.mrb[0].mxu0 %v1422
    %v1461 = vpop.f32.mrb[0].mxu0
    %v1462 = vadd.f32 %v1396, %v1461
    %v1463 = vpop.f32.mrb[0].mxu0
    %v1464 = vpop.f32.mrb[0].mxu0
    %v1465 = vadd.f32 %v1396, %v1464
    %v1466 = vpop.f32.mrb[0].mxu0
    %1467 = vmatprep.mubr.bf16.mxu0 0
    %1468 = vmatmul.mubr.bf16.gmra.mrb[0].mxu0 %v1425
    %v1469 = vpop.f32.mrb[0].mxu0
    %v1470 = vadd.f32 %v1396, %v1469
    %v1471 = vpop.f32.mrb[0].mxu0
    %v1472 = vpop.f32.mrb[0].mxu0
    %v1473 = vadd.f32 %v1396, %v1472
    %v1474 = vpop.f32.mrb[0].mxu0
    %1475 = vdwg.mxu0
    %v1476 = vlaneseq
    %v1477 = vshrl.u32 %v1476, 7
    %v1478 = vsub.s32 5, %v1477
    %v1479 = vrot.slane %v33, %v1478
    %v1480 = vmul.f32 %v1462, %v1479
    %v1481 = vmul.f32 %v1465, %v1479
    %v1482 = vmul.f32 %v1470, %v1479
    %v1483 = vmul.f32 %v1473, %v1479
    %v1484 = vlaneseq
    %v1485 = vshrl.u32 %v1484, 7
    %v1486 = vsub.s32 6, %v1485
    %v1487 = vrot.slane %v33, %v1486
    %v1488 = vadd.f32 %v1480, %v1487
    %v1489 = vadd.f32 %v1481, %v1487
    %v1490 = vadd.f32 %v1482, %v1487
    %v1491 = vadd.f32 %v1483, %v1487
    %v1492 = vadd.f32 %v1136, %v1488
    %v1493 = vadd.f32 %v1137, %v1489
    %v1494 = vadd.f32 %v1138, %v1490
    %v1495 = vadd.f32 %v1139, %v1491
    %1496 = vst.msk [vmem:[#allocation2] sm:$0xff] %vm35, %v1492
    %1497 = vst.msk [vmem:[#allocation2 + $0x8] sm:$0xff] %vm35, %v1493
    %1498 = vst.msk [vmem:[#allocation2 + $0x10] sm:$0xff] %vm35, %v1494
    %1499 = vst.msk [vmem:[#allocation2 + $0x18] sm:$0xff] %vm35, %v1495
    // Predicated region
    $region30: #{tpu_custom_call.1} parent=1 // pred_check
      _
    $region31: #{tpu_custom_call.1} parent=1 // pred_check_branch
      %1501 = sbr.rel (0) target = $region33
    $region32: #{tpu_custom_call.1} parent=1 // pred_region
      %s1503 = ssub.s32 512, 512
      %1504 = vsyncadd [#allocation3], %s1503
      %s1505 = sshll.u32 [#allocation2], 4
      %s1506 = int_to_ptr.vmem [resolvable:$true] %s1505
      %1511 = dma.vmem_to_hbm [thread:$0]  %s1506, 512, %s7, [#allocation3], 128, 128, 8
    $region33: #{tpu_custom_call.1} parent=1 // pred_fallthru
      _
    // Predicated region
    $region34: #{tpu_custom_call.1} parent=1 // pred_check
      _
    $region35: #{tpu_custom_call.1} parent=1 // pred_check_branch
      %1513 = sbr.rel (0) target = $region37
    $region36: #{tpu_custom_call.1} parent=1 // pred_region
      %1514 = dma.done [#allocation3], 512
    $region37: #{tpu_custom_call.1} parent=1 // pred_fallthru
      _
    %1515 = vsyncpa [#allocation3], 1

</llo_original>
